<compile_context>
chip_gen: v6e
topology: v6e:2x2x1
jax: 0.10.0
libtpu: 0.0.40
codegen_flags: <defaults>
</compile_context>

<pallas_src>
import functools
import operator

import jax
import jax.numpy as jnp
from jax.experimental import pallas as pl
from jax.experimental.pallas import tpu as pltpu

EPS = 1e-5

# rows of the packed per-layer vector tensor [L, 16, C]
_BQ, _BK, _BV, _BO, _LN1_G, _LN1_B, _B2, _LN2_G, _LN2_B = range(9)
_N_VEC_ROWS = 16  # padded to a sublane multiple


def _ln(x, g, b):
    """f32 LayerNorm over the last axis; g/b broadcastable [1, C]."""
    m = jnp.mean(x, axis=-1, keepdims=True)
    v = jnp.mean((x - m) ** 2, axis=-1, keepdims=True)
    return (x - m) * jax.lax.rsqrt(v + EPS) * g + b


def _fused_encoder_kernel(
    x_ref, ln0_ref, wqkv_ref, wo_ref, w1_ref, w2_ref, vecs_ref, b1_ref,
    feats_ref, attn_ref,
    x_scr,
    *, num_heads, feature_layers,
):
    l = pl.program_id(1)
    n_layers = pl.num_programs(1)

    # ---- layer 0: pre-loop LayerNorm of the raw input into the carry scratch ----
    @pl.when(l == 0)
    def _():
        ln0 = ln0_ref[...].astype(jnp.float32)          # [2, C] (gamma, beta)
        x0 = x_ref[0].astype(jnp.float32)               # [T, C]
        x_scr[...] = _ln(x0, ln0[0:1], ln0[1:2])

    x = x_scr[...]                                      # [T, C] f32 carry
    T, C = x.shape
    dh = C // num_heads
    scale = dh ** -0.5

    vec = vecs_ref[0].astype(jnp.float32)               # [16, C] packed vectors
    bq, bk, bv, bo = (vec[_BQ:_BQ + 1], vec[_BK:_BK + 1],
                      vec[_BV:_BV + 1], vec[_BO:_BO + 1])
    ln1_g, ln1_b = vec[_LN1_G:_LN1_G + 1], vec[_LN1_B:_LN1_B + 1]
    b2 = vec[_B2:_B2 + 1]
    ln2_g, ln2_b = vec[_LN2_G:_LN2_G + 1], vec[_LN2_B:_LN2_B + 1]

    x_bf = x.astype(jnp.bfloat16)
    wqkv = wqkv_ref[0]                                  # [3, C, C] bf16

    # --- QKV projections: full-width bf16 MXU matmuls, f32 accumulation ---
    q = (jnp.dot(x_bf, wqkv[0], preferred_element_type=jnp.float32) + bq) * scale
    k = jnp.dot(x_bf, wqkv[1], preferred_element_type=jnp.float32) + bk
    v = jnp.dot(x_bf, wqkv[2], preferred_element_type=jnp.float32) + bv

    # --- split heads -> [H, T, dh] (leading batch dim) ---
    def heads(y):
        return jnp.stack([y[:, h * dh:(h + 1) * dh] for h in range(num_heads)], axis=0)

    qh = heads(q.astype(jnp.bfloat16))
    kh = heads(k.astype(jnp.bfloat16))
    vh = heads(v.astype(jnp.bfloat16))

    # --- batched scaled dot-product attention ---
    s = jnp.einsum('htd,hsd->hts', qh, kh,
                   preferred_element_type=jnp.float32)              # [H, T, T]
    s = s - jnp.max(s, axis=-1, keepdims=True)
    p = jnp.exp(s)
    p = p * pl.reciprocal(jnp.sum(p, axis=-1, keepdims=True), approx=True)

    ctx = jnp.einsum('hts,hsd->htd', p.astype(jnp.bfloat16), vh,
                     preferred_element_type=jnp.float32)            # [H, T, dh]
    ctx = jnp.concatenate([ctx[h] for h in range(num_heads)], axis=-1)  # [T, C]

    attn_out = jnp.dot(ctx.astype(jnp.bfloat16), wo_ref[0],
                       preferred_element_type=jnp.float32) + bo

    # attention probs (averaged over heads) only emitted on the end layer
    @pl.when(l == n_layers - 1)
    def _():
        attn_ref[0] = (jnp.sum(p, axis=0) * (1.0 / num_heads)).astype(attn_ref.dtype)

    # --- residual + self_attn_layer_norm ---
    x1 = _ln(x + attn_out, ln1_g, ln1_b)

    # --- FFN: relu(fc1) -> fc2, residual, final_layer_norm ---
    h1 = jnp.maximum(
        jnp.dot(x1.astype(jnp.bfloat16), w1_ref[0],
                preferred_element_type=jnp.float32) + b1_ref[0], 0.0)
    y = jnp.dot(h1.astype(jnp.bfloat16), w2_ref[0],
                preferred_element_type=jnp.float32) + b2
    x2 = _ln(x1 + y, ln2_g, ln2_b)

    x_scr[...] = x2                                     # carry to next layer

    # write this layer's features only if it is a requested feature layer
    is_feature = functools.reduce(operator.or_, [l == fl for fl in feature_layers])

    @pl.when(is_feature)
    def _():
        feats_ref[0, 0] = x2.astype(feats_ref.dtype)


def transformer_encoder_forward(x, params, num_heads, feature_layer, segment_layer):
    """Mirrors TransformerEncoder.extract_features (layer_norm_first=False, eval)."""
    feature_layer = sorted(set(int(i) for i in feature_layer))
    assert feature_layer, "feature_layer must be non-empty"
    end_layer = max(feature_layer + [segment_layer])
    n_layers = end_layer + 1
    n_feat = len(feature_layer)

    B, T, C = x.shape
    F = params["w1"].shape[-1]
    L = params["wqkv"].shape[0]
    assert n_layers <= L, "requested layer deeper than the encoder"

    def feats_map(b, l):
        # slot = index of the most recent feature layer <= l (clamped to 0);
        # block index stays constant between feature layers so the VMEM buffer
        # (written only at feature layers) is flushed with the right contents.
        cnt = functools.reduce(
            operator.add, [(l >= fl).astype(jnp.int32) for fl in feature_layer])
        return (jnp.maximum(cnt - 1, 0), b, 0, 0)

    in_specs = [
        pl.BlockSpec((1, T, C), lambda b, l: (b, 0, 0)),            # x
        pl.BlockSpec((2, C), lambda b, l: (0, 0)),                  # top-level LN (g, b)
        pl.BlockSpec((1, 3, C, C), lambda b, l: (l, 0, 0, 0)),      # Wq|Wk|Wv
        pl.BlockSpec((1, C, C), lambda b, l: (l, 0, 0)),            # Wo
        pl.BlockSpec((1, C, F), lambda b, l: (l, 0, 0)),            # fc1 W
        pl.BlockSpec((1, F, C), lambda b, l: (l, 0, 0)),            # fc2 W
        pl.BlockSpec((1, _N_VEC_ROWS, C), lambda b, l: (l, 0, 0)),  # packed biases/LN
        pl.BlockSpec((1, 1, F), lambda b, l: (l, 0, 0)),            # fc1 bias
    ]
    out_specs = (
        pl.BlockSpec((1, 1, T, C), feats_map),                      # layer features
        pl.BlockSpec((1, T, T), lambda b, l: (b, 0, 0)),            # attn probs
    )
    out_shape = (
        jax.ShapeDtypeStruct((n_feat, B, T, C), x.dtype),
        jax.ShapeDtypeStruct((B, T, T), jnp.float32),
    )

    kernel = functools.partial(
        _fused_encoder_kernel, num_heads=num_heads,
        feature_layers=tuple(feature_layer))

    feats, attn = pl.pallas_call(
        kernel,
        out_shape=out_shape,
        grid=(B, n_layers),
        in_specs=in_specs,
        out_specs=out_specs,
        scratch_shapes=[pltpu.VMEM((T, C), jnp.float32)],
        compiler_params=pltpu.CompilerParams(
            dimension_semantics=("parallel", "arbitrary")),
    )(x, params["ln0"], params["wqkv"], params["wo"], params["w1"], params["w2"],
      params["vecs"], params["b1"])

    layer_feats = [feats[i] for i in range(n_feat)]
    return layer_feats, attn


# --------------------------- Parameter construction -------------------------
def init_params(key, num_layers, C, F, w_dtype=jnp.bfloat16):
    """init_bert_params: Linear weight ~ N(0, 0.02), bias = 0, LN weight=1 bias=0.

    Big matmul weights are stored in bf16 (MXU path); biases / LN affine stay f32.
    """
    def lin(k, shape):
        return (0.02 * jax.random.normal(k, shape)).astype(jnp.float32)

    keys = jax.random.split(key, num_layers)
    wqkv, wo, w1, w2, vecs, b1 = [], [], [], [], [], []
    for i in range(num_layers):
        ks = jax.random.split(keys[i], 6)
        wqkv.append(jnp.stack([lin(ks[0], (C, C)),
                               lin(ks[1], (C, C)),
                               lin(ks[2], (C, C))], axis=0))         # [3, C, C]
        wo.append(lin(ks[3], (C, C)))
        w1.append(lin(ks[4], (C, F)))
        w2.append(lin(ks[5], (F, C)))
        v = jnp.zeros((_N_VEC_ROWS, C), jnp.float32)
        v = v.at[_LN1_G].set(1.0).at[_LN2_G].set(1.0)  # LN gammas=1, biases/betas=0
        vecs.append(v)
        b1.append(jnp.zeros((1, F), jnp.float32))

    return dict(
        ln0=jnp.stack([jnp.ones((C,), jnp.float32),
                       jnp.zeros((C,), jnp.float32)], axis=0),       # [2, C]
        wqkv=jnp.stack(wqkv).astype(w_dtype),                        # [L, 3, C, C]
        wo=jnp.stack(wo).astype(w_dtype),                            # [L, C, C]
        w1=jnp.stack(w1).astype(w_dtype),                            # [L, C, F]
        w2=jnp.stack(w2).astype(w_dtype),                            # [L, F, C]
        vecs=jnp.stack(vecs),                                        # [L, 16, C] f32
        b1=jnp.stack(b1),                                            # [L, 1, F] f32
    )


if __name__ == "__main__":
    B, T, C = 2, 8, 32           # batch, seq, encoder_embed_dim
    H, F = 4, 64                 # encoder_attention_heads, encoder_ffn_embed_dim
    NUM_LAYERS = 3               # encoder_layers
    feature_layer = [1]
    segment_layer = 2            # end_layer = 2 (< encoder_layers)

    key = jax.random.PRNGKey(0)
    kx, kp = jax.random.split(key)
    x = jax.random.normal(kx, (B, T, C), dtype=jnp.float32)
    params = init_params(kp, NUM_LAYERS, C, F)

    layer_feats, attn_weights = transformer_encoder_forward(
        x, params, H, feature_layer, segment_layer)

    for f in layer_feats:
        jax.block_until_ready(f)
    jax.block_until_ready(attn_weights)

    assert layer_feats[0].shape == (B, T, C)
    assert attn_weights.shape == (B, T, T)
    assert bool(jnp.all(jnp.isfinite(layer_feats[0])))
    assert bool(jnp.all(jnp.isfinite(attn_weights)))
    print("KERNEL_OK")
</pallas_src>

<mosaic_0001>
module attributes {stable_mosaic.version = 11 : i64} {
  func.func @_fused_encoder_kernel(%arg0: i32, %arg1: i32, %arg2: memref<1x8x32xf32, #tpu.memory_space<vmem>>, %arg3: memref<2x32xf32, #tpu.memory_space<vmem>>, %arg4: memref<1x3x32x32xbf16, #tpu.memory_space<vmem>>, %arg5: memref<1x32x32xbf16, #tpu.memory_space<vmem>>, %arg6: memref<1x32x64xbf16, #tpu.memory_space<vmem>>, %arg7: memref<1x64x32xbf16, #tpu.memory_space<vmem>>, %arg8: memref<1x16x32xf32, #tpu.memory_space<vmem>>, %arg9: memref<1x1x64xf32, #tpu.memory_space<vmem>>, %arg10: memref<1x1x8x32xf32, #tpu.memory_space<vmem>>, %arg11: memref<1x8x8xf32, #tpu.memory_space<vmem>>, %arg12: memref<8x32xf32, #tpu.memory_space<vmem>>) attributes {dimension_semantics = [#tpu.dimension_semantics<parallel>, #tpu.dimension_semantics<arbitrary>], iteration_bounds = array<i64: 2, 3>, scalar_prefetch = 0 : i64, scratch_operands = 1 : i64, tpu.core_type = #tpu.core_type<tc>, window_params = [{transform_indices = @transform_0, window_bounds = array<i64: 1, 8, 32>}, {pipeline_mode = #tpu.pipeline_mode<synchronous>, transform_indices = @transform_1, window_bounds = array<i64: 2, 32>}, {transform_indices = @transform_2, window_bounds = array<i64: 1, 3, 32, 32>}, {transform_indices = @transform_3, window_bounds = array<i64: 1, 32, 32>}, {transform_indices = @transform_4, window_bounds = array<i64: 1, 32, 64>}, {transform_indices = @transform_5, window_bounds = array<i64: 1, 64, 32>}, {transform_indices = @transform_6, window_bounds = array<i64: 1, 16, 32>}, {transform_indices = @transform_7, window_bounds = array<i64: 1, 1, 64>}, {transform_indices = @transform_8, window_bounds = array<i64: 1, 1, 8, 32>}, {transform_indices = @transform_9, window_bounds = array<i64: 1, 8, 8>}]} {
    %c0_i32 = arith.constant 0 : i32
    %0 = arith.cmpi eq, %arg1, %c0_i32 : i32
    %1 = arith.extui %0 : i1 to i32
    %c0_i32_0 = arith.constant 0 : i32
    %2 = arith.cmpi ne, %1, %c0_i32_0 : i32
    scf.if %2 {
      %c0_46 = arith.constant 0 : index
      %c0_47 = arith.constant 0 : index
      %162 = vector.load %arg3[%c0_46, %c0_47] : memref<2x32xf32, #tpu.memory_space<vmem>>, vector<2x32xf32>
      %c0_48 = arith.constant 0 : index
      %c0_49 = arith.constant 0 : index
      %c0_50 = arith.constant 0 : index
      %163 = vector.load %arg2[%c0_48, %c0_49, %c0_50] : memref<1x8x32xf32, #tpu.memory_space<vmem>>, vector<1x8x32xf32>
      %164 = vector.shape_cast %163 : vector<1x8x32xf32> to vector<8x32xf32>
      %165 = vector.extract_strided_slice %162 {offsets = [0, 0], sizes = [1, 32], strides = [1, 1]} : vector<2x32xf32> to vector<1x32xf32>
      %166 = vector.extract_strided_slice %162 {offsets = [1, 0], sizes = [1, 32], strides = [1, 1]} : vector<2x32xf32> to vector<1x32xf32>
      %cst_51 = arith.constant dense<0.000000e+00> : vector<8xf32>
      %167 = vector.multi_reduction <add>, %164, %cst_51 [1] : vector<8x32xf32> to vector<8xf32>
      %168 = vector.shape_cast %167 : vector<8xf32> to vector<8x1xf32>
      %cst_52 = arith.constant 3.200000e+01 : f32
      %169 = vector.broadcast %cst_52 : f32 to vector<8x1xf32>
      %170 = arith.divf %168, %169 : vector<8x1xf32>
      %171 = vector.broadcast %170 : vector<8x1xf32> to vector<8x32xf32>
      %172 = arith.subf %164, %171 : vector<8x32xf32>
      %173 = arith.mulf %172, %172 : vector<8x32xf32>
      %cst_53 = arith.constant dense<0.000000e+00> : vector<8xf32>
      %174 = vector.multi_reduction <add>, %173, %cst_53 [1] : vector<8x32xf32> to vector<8xf32>
      %175 = vector.shape_cast %174 : vector<8xf32> to vector<8x1xf32>
      %cst_54 = arith.constant 3.200000e+01 : f32
      %176 = vector.broadcast %cst_54 : f32 to vector<8x1xf32>
      %177 = arith.divf %175, %176 : vector<8x1xf32>
      %178 = vector.broadcast %170 : vector<8x1xf32> to vector<8x32xf32>
      %179 = arith.subf %164, %178 : vector<8x32xf32>
      %cst_55 = arith.constant 9.99999974E-6 : f32
      %180 = vector.broadcast %cst_55 : f32 to vector<8x1xf32>
      %181 = arith.addf %177, %180 : vector<8x1xf32>
      %182 = math.rsqrt %181 : vector<8x1xf32>
      %183 = vector.broadcast %182 : vector<8x1xf32> to vector<8x32xf32>
      %184 = arith.mulf %179, %183 : vector<8x32xf32>
      %185 = vector.broadcast %165 : vector<1x32xf32> to vector<8x32xf32>
      %186 = arith.mulf %184, %185 : vector<8x32xf32>
      %187 = vector.broadcast %166 : vector<1x32xf32> to vector<8x32xf32>
      %188 = arith.addf %186, %187 : vector<8x32xf32>
      %c0_56 = arith.constant 0 : index
      %c0_57 = arith.constant 0 : index
      %189 = vector.load %arg12[%c0_56, %c0_57] : memref<8x32xf32, #tpu.memory_space<vmem>>, vector<8x32xf32>
      tpu.vector_store %arg12[%c0_56, %c0_57], %188 {strides = array<i32>} : memref<8x32xf32, #tpu.memory_space<vmem>>, vector<8x32xf32>,
    } else {
    }
    %c0 = arith.constant 0 : index
    %c0_1 = arith.constant 0 : index
    %3 = vector.load %arg12[%c0, %c0_1] : memref<8x32xf32, #tpu.memory_space<vmem>>, vector<8x32xf32>
    %c0_2 = arith.constant 0 : index
    %c0_3 = arith.constant 0 : index
    %c0_4 = arith.constant 0 : index
    %4 = vector.load %arg8[%c0_2, %c0_3, %c0_4] : memref<1x16x32xf32, #tpu.memory_space<vmem>>, vector<1x16x32xf32>
    %5 = vector.shape_cast %4 : vector<1x16x32xf32> to vector<16x32xf32>
    %6 = vector.extract_strided_slice %5 {offsets = [0, 0], sizes = [1, 32], strides = [1, 1]} : vector<16x32xf32> to vector<1x32xf32>
    %7 = vector.extract_strided_slice %5 {offsets = [1, 0], sizes = [1, 32], strides = [1, 1]} : vector<16x32xf32> to vector<1x32xf32>
    %8 = vector.extract_strided_slice %5 {offsets = [2, 0], sizes = [1, 32], strides = [1, 1]} : vector<16x32xf32> to vector<1x32xf32>
    %9 = vector.extract_strided_slice %5 {offsets = [3, 0], sizes = [1, 32], strides = [1, 1]} : vector<16x32xf32> to vector<1x32xf32>
    %10 = vector.extract_strided_slice %5 {offsets = [4, 0], sizes = [1, 32], strides = [1, 1]} : vector<16x32xf32> to vector<1x32xf32>
    %11 = vector.extract_strided_slice %5 {offsets = [5, 0], sizes = [1, 32], strides = [1, 1]} : vector<16x32xf32> to vector<1x32xf32>
    %12 = vector.extract_strided_slice %5 {offsets = [6, 0], sizes = [1, 32], strides = [1, 1]} : vector<16x32xf32> to vector<1x32xf32>
    %13 = vector.extract_strided_slice %5 {offsets = [7, 0], sizes = [1, 32], strides = [1, 1]} : vector<16x32xf32> to vector<1x32xf32>
    %14 = vector.extract_strided_slice %5 {offsets = [8, 0], sizes = [1, 32], strides = [1, 1]} : vector<16x32xf32> to vector<1x32xf32>
    %15 = arith.truncf %3 : vector<8x32xf32> to vector<8x32xbf16>
    %c0_5 = arith.constant 0 : index
    %c0_6 = arith.constant 0 : index
    %c0_7 = arith.constant 0 : index
    %c0_8 = arith.constant 0 : index
    %16 = vector.load %arg4[%c0_5, %c0_6, %c0_7, %c0_8] : memref<1x3x32x32xbf16, #tpu.memory_space<vmem>>, vector<1x3x32x32xbf16>
    %17 = vector.shape_cast %16 : vector<1x3x32x32xbf16> to vector<3x32x32xbf16>
    %18 = vector.extract_strided_slice %17 {offsets = [0, 0, 0], sizes = [1, 32, 32], strides = [1, 1, 1]} : vector<3x32x32xbf16> to vector<1x32x32xbf16>
    %19 = vector.shape_cast %18 : vector<1x32x32xbf16> to vector<32x32xbf16>
    %cst = arith.constant dense<0.000000e+00> : vector<8x32xf32>
    %20 = tpu.matmul %15, %19, %cst {dimension_numbers = #tpu.dot_dimension_numbers<[1], [0], [0], [1], [0, 0, 1, 1], [], []>} : vector<8x32xbf16>, vector<32x32xbf16>, vector<8x32xf32> -> vector<8x32xf32>
    %21 = vector.broadcast %6 : vector<1x32xf32> to vector<8x32xf32>
    %22 = arith.addf %20, %21 : vector<8x32xf32>
    %cst_9 = arith.constant 0.353553385 : f32
    %23 = vector.broadcast %cst_9 : f32 to vector<8x32xf32>
    %24 = arith.mulf %22, %23 : vector<8x32xf32>
    %25 = vector.extract_strided_slice %17 {offsets = [1, 0, 0], sizes = [1, 32, 32], strides = [1, 1, 1]} : vector<3x32x32xbf16> to vector<1x32x32xbf16>
    %26 = vector.shape_cast %25 : vector<1x32x32xbf16> to vector<32x32xbf16>
    %cst_10 = arith.constant dense<0.000000e+00> : vector<8x32xf32>
    %27 = tpu.matmul %15, %26, %cst_10 {dimension_numbers = #tpu.dot_dimension_numbers<[1], [0], [0], [1], [0, 0, 1, 1], [], []>} : vector<8x32xbf16>, vector<32x32xbf16>, vector<8x32xf32> -> vector<8x32xf32>
    %28 = vector.broadcast %7 : vector<1x32xf32> to vector<8x32xf32>
    %29 = arith.addf %27, %28 : vector<8x32xf32>
    %30 = vector.extract_strided_slice %17 {offsets = [2, 0, 0], sizes = [1, 32, 32], strides = [1, 1, 1]} : vector<3x32x32xbf16> to vector<1x32x32xbf16>
    %31 = vector.shape_cast %30 : vector<1x32x32xbf16> to vector<32x32xbf16>
    %cst_11 = arith.constant dense<0.000000e+00> : vector<8x32xf32>
    %32 = tpu.matmul %15, %31, %cst_11 {dimension_numbers = #tpu.dot_dimension_numbers<[1], [0], [0], [1], [0, 0, 1, 1], [], []>} : vector<8x32xbf16>, vector<32x32xbf16>, vector<8x32xf32> -> vector<8x32xf32>
    %33 = vector.broadcast %8 : vector<1x32xf32> to vector<8x32xf32>
    %34 = arith.addf %32, %33 : vector<8x32xf32>
    %35 = arith.truncf %24 : vector<8x32xf32> to vector<8x32xbf16>
    %36 = vector.extract_strided_slice %35 {offsets = [0, 0], sizes = [8, 8], strides = [1, 1]} : vector<8x32xbf16> to vector<8x8xbf16>
    %37 = vector.extract_strided_slice %35 {offsets = [0, 8], sizes = [8, 8], strides = [1, 1]} : vector<8x32xbf16> to vector<8x8xbf16>
    %38 = vector.extract_strided_slice %35 {offsets = [0, 16], sizes = [8, 8], strides = [1, 1]} : vector<8x32xbf16> to vector<8x8xbf16>
    %39 = vector.extract_strided_slice %35 {offsets = [0, 24], sizes = [8, 8], strides = [1, 1]} : vector<8x32xbf16> to vector<8x8xbf16>
    %40 = vector.shape_cast %36 : vector<8x8xbf16> to vector<1x8x8xbf16>
    %41 = vector.shape_cast %37 : vector<8x8xbf16> to vector<1x8x8xbf16>
    %42 = vector.shape_cast %38 : vector<8x8xbf16> to vector<1x8x8xbf16>
    %43 = vector.shape_cast %39 : vector<8x8xbf16> to vector<1x8x8xbf16>
    %44 = tpu.concatenate %40, %41, %42, %43 in 0 : vector<1x8x8xbf16>, vector<1x8x8xbf16>, vector<1x8x8xbf16>, vector<1x8x8xbf16> -> vector<4x8x8xbf16>
    %45 = arith.truncf %29 : vector<8x32xf32> to vector<8x32xbf16>
    %46 = vector.extract_strided_slice %45 {offsets = [0, 0], sizes = [8, 8], strides = [1, 1]} : vector<8x32xbf16> to vector<8x8xbf16>
    %47 = vector.extract_strided_slice %45 {offsets = [0, 8], sizes = [8, 8], strides = [1, 1]} : vector<8x32xbf16> to vector<8x8xbf16>
    %48 = vector.extract_strided_slice %45 {offsets = [0, 16], sizes = [8, 8], strides = [1, 1]} : vector<8x32xbf16> to vector<8x8xbf16>
    %49 = vector.extract_strided_slice %45 {offsets = [0, 24], sizes = [8, 8], strides = [1, 1]} : vector<8x32xbf16> to vector<8x8xbf16>
    %50 = vector.shape_cast %46 : vector<8x8xbf16> to vector<1x8x8xbf16>
    %51 = vector.shape_cast %47 : vector<8x8xbf16> to vector<1x8x8xbf16>
    %52 = vector.shape_cast %48 : vector<8x8xbf16> to vector<1x8x8xbf16>
    %53 = vector.shape_cast %49 : vector<8x8xbf16> to vector<1x8x8xbf16>
    %54 = tpu.concatenate %50, %51, %52, %53 in 0 : vector<1x8x8xbf16>, vector<1x8x8xbf16>, vector<1x8x8xbf16>, vector<1x8x8xbf16> -> vector<4x8x8xbf16>
    %55 = arith.truncf %34 : vector<8x32xf32> to vector<8x32xbf16>
    %56 = vector.extract_strided_slice %55 {offsets = [0, 0], sizes = [8, 8], strides = [1, 1]} : vector<8x32xbf16> to vector<8x8xbf16>
    %57 = vector.extract_strided_slice %55 {offsets = [0, 8], sizes = [8, 8], strides = [1, 1]} : vector<8x32xbf16> to vector<8x8xbf16>
    %58 = vector.extract_strided_slice %55 {offsets = [0, 16], sizes = [8, 8], strides = [1, 1]} : vector<8x32xbf16> to vector<8x8xbf16>
    %59 = vector.extract_strided_slice %55 {offsets = [0, 24], sizes = [8, 8], strides = [1, 1]} : vector<8x32xbf16> to vector<8x8xbf16>
    %60 = vector.shape_cast %56 : vector<8x8xbf16> to vector<1x8x8xbf16>
    %61 = vector.shape_cast %57 : vector<8x8xbf16> to vector<1x8x8xbf16>
    %62 = vector.shape_cast %58 : vector<8x8xbf16> to vector<1x8x8xbf16>
    %63 = vector.shape_cast %59 : vector<8x8xbf16> to vector<1x8x8xbf16>
    %64 = tpu.concatenate %60, %61, %62, %63 in 0 : vector<1x8x8xbf16>, vector<1x8x8xbf16>, vector<1x8x8xbf16>, vector<1x8x8xbf16> -> vector<4x8x8xbf16>
    "tpu.trace_start"() <{level = 10 : i32, message = "htd,hsd->hts"}> : () -> ()
    %cst_12 = arith.constant dense<0.000000e+00> : vector<4x8x8xf32>
    %65 = tpu.matmul %44, %54, %cst_12 {dimension_numbers = #tpu.dot_dimension_numbers<[2], [2], [1], [1], [0, 0, 0, 1, 1, 1], [0], [0]>} : vector<4x8x8xbf16>, vector<4x8x8xbf16>, vector<4x8x8xf32> -> vector<4x8x8xf32>
    "tpu.trace_stop"() : () -> ()
    %cst_13 = arith.constant dense<0xFF800000> : vector<4x8xf32>
    %66 = vector.multi_reduction <maximumf>, %65, %cst_13 [2] : vector<4x8x8xf32> to vector<4x8xf32>
    %67 = vector.shape_cast %66 : vector<4x8xf32> to vector<4x8x1xf32>
    %68 = vector.broadcast %67 : vector<4x8x1xf32> to vector<4x8x8xf32>
    %69 = arith.subf %65, %68 : vector<4x8x8xf32>
    %70 = math.exp %69 : vector<4x8x8xf32>
    %cst_14 = arith.constant dense<0.000000e+00> : vector<4x8xf32>
    %71 = vector.multi_reduction <add>, %70, %cst_14 [2] : vector<4x8x8xf32> to vector<4x8xf32>
    %72 = vector.shape_cast %71 : vector<4x8xf32> to vector<4x8x1xf32>
    %73 = tpu.reciprocal %72 {approx = true} : vector<4x8x1xf32> -> vector<4x8x1xf32>
    %74 = vector.broadcast %73 : vector<4x8x1xf32> to vector<4x8x8xf32>
    %75 = arith.mulf %70, %74 : vector<4x8x8xf32>
    %76 = arith.truncf %75 : vector<4x8x8xf32> to vector<4x8x8xbf16>
    "tpu.trace_start"() <{level = 10 : i32, message = "hts,hsd->htd"}> : () -> ()
    %cst_15 = arith.constant dense<0.000000e+00> : vector<4x8x8xf32>
    %77 = tpu.matmul %76, %64, %cst_15 {dimension_numbers = #tpu.dot_dimension_numbers<[2], [1], [1], [2], [0, 0, 0, 1, 1, 2], [0], [0]>} : vector<4x8x8xbf16>, vector<4x8x8xbf16>, vector<4x8x8xf32> -> vector<4x8x8xf32>
    "tpu.trace_stop"() : () -> ()
    %78 = vector.extract_strided_slice %77 {offsets = [0, 0, 0], sizes = [1, 8, 8], strides = [1, 1, 1]} : vector<4x8x8xf32> to vector<1x8x8xf32>
    %79 = vector.shape_cast %78 : vector<1x8x8xf32> to vector<8x8xf32>
    %80 = vector.extract_strided_slice %77 {offsets = [1, 0, 0], sizes = [1, 8, 8], strides = [1, 1, 1]} : vector<4x8x8xf32> to vector<1x8x8xf32>
    %81 = vector.shape_cast %80 : vector<1x8x8xf32> to vector<8x8xf32>
    %82 = vector.extract_strided_slice %77 {offsets = [2, 0, 0], sizes = [1, 8, 8], strides = [1, 1, 1]} : vector<4x8x8xf32> to vector<1x8x8xf32>
    %83 = vector.shape_cast %82 : vector<1x8x8xf32> to vector<8x8xf32>
    %84 = vector.extract_strided_slice %77 {offsets = [3, 0, 0], sizes = [1, 8, 8], strides = [1, 1, 1]} : vector<4x8x8xf32> to vector<1x8x8xf32>
    %85 = vector.shape_cast %84 : vector<1x8x8xf32> to vector<8x8xf32>
    %86 = tpu.concatenate %79, %81, %83, %85 in 1 : vector<8x8xf32>, vector<8x8xf32>, vector<8x8xf32>, vector<8x8xf32> -> vector<8x32xf32>
    %87 = arith.truncf %86 : vector<8x32xf32> to vector<8x32xbf16>
    %c0_16 = arith.constant 0 : index
    %c0_17 = arith.constant 0 : index
    %c0_18 = arith.constant 0 : index
    %88 = vector.load %arg5[%c0_16, %c0_17, %c0_18] : memref<1x32x32xbf16, #tpu.memory_space<vmem>>, vector<1x32x32xbf16>
    %89 = vector.shape_cast %88 : vector<1x32x32xbf16> to vector<32x32xbf16>
    %cst_19 = arith.constant dense<0.000000e+00> : vector<8x32xf32>
    %90 = tpu.matmul %87, %89, %cst_19 {dimension_numbers = #tpu.dot_dimension_numbers<[1], [0], [0], [1], [0, 0, 1, 1], [], []>} : vector<8x32xbf16>, vector<32x32xbf16>, vector<8x32xf32> -> vector<8x32xf32>
    %91 = vector.broadcast %9 : vector<1x32xf32> to vector<8x32xf32>
    %92 = arith.addf %90, %91 : vector<8x32xf32>
    %c2_i32 = arith.constant 2 : i32
    %93 = arith.cmpi eq, %arg1, %c2_i32 : i32
    %94 = arith.extui %93 : i1 to i32
    %c0_i32_20 = arith.constant 0 : i32
    %95 = arith.cmpi ne, %94, %c0_i32_20 : i32
    scf.if %95 {
      %cst_46 = arith.constant dense<0.000000e+00> : vector<8x8xf32>
      %162 = vector.multi_reduction <add>, %75, %cst_46 [0] : vector<4x8x8xf32> to vector<8x8xf32>
      %cst_47 = arith.constant 2.500000e-01 : f32
      %163 = vector.broadcast %cst_47 : f32 to vector<8x8xf32>
      %164 = arith.mulf %162, %163 : vector<8x8xf32>
      %c0_48 = arith.constant 0 : index
      %c0_49 = arith.constant 0 : index
      %c0_50 = arith.constant 0 : index
      %165 = vector.load %arg11[%c0_48, %c0_49, %c0_50] : memref<1x8x8xf32, #tpu.memory_space<vmem>>, vector<1x8x8xf32>
      %166 = vector.shape_cast %165 : vector<1x8x8xf32> to vector<8x8xf32>
      %167 = vector.shape_cast %164 : vector<8x8xf32> to vector<1x8x8xf32>
      tpu.vector_store %arg11[%c0_48, %c0_49, %c0_50], %167 {strides = array<i32>} : memref<1x8x8xf32, #tpu.memory_space<vmem>>, vector<1x8x8xf32>,
    } else {
    }
    %96 = arith.addf %3, %92 : vector<8x32xf32>
    %cst_21 = arith.constant dense<0.000000e+00> : vector<8xf32>
    %97 = vector.multi_reduction <add>, %96, %cst_21 [1] : vector<8x32xf32> to vector<8xf32>
    %98 = vector.shape_cast %97 : vector<8xf32> to vector<8x1xf32>
    %cst_22 = arith.constant 3.200000e+01 : f32
    %99 = vector.broadcast %cst_22 : f32 to vector<8x1xf32>
    %100 = arith.divf %98, %99 : vector<8x1xf32>
    %101 = vector.broadcast %100 : vector<8x1xf32> to vector<8x32xf32>
    %102 = arith.subf %96, %101 : vector<8x32xf32>
    %103 = arith.mulf %102, %102 : vector<8x32xf32>
    %cst_23 = arith.constant dense<0.000000e+00> : vector<8xf32>
    %104 = vector.multi_reduction <add>, %103, %cst_23 [1] : vector<8x32xf32> to vector<8xf32>
    %105 = vector.shape_cast %104 : vector<8xf32> to vector<8x1xf32>
    %cst_24 = arith.constant 3.200000e+01 : f32
    %106 = vector.broadcast %cst_24 : f32 to vector<8x1xf32>
    %107 = arith.divf %105, %106 : vector<8x1xf32>
    %108 = vector.broadcast %100 : vector<8x1xf32> to vector<8x32xf32>
    %109 = arith.subf %96, %108 : vector<8x32xf32>
    %cst_25 = arith.constant 9.99999974E-6 : f32
    %110 = vector.broadcast %cst_25 : f32 to vector<8x1xf32>
    %111 = arith.addf %107, %110 : vector<8x1xf32>
    %112 = math.rsqrt %111 : vector<8x1xf32>
    %113 = vector.broadcast %112 : vector<8x1xf32> to vector<8x32xf32>
    %114 = arith.mulf %109, %113 : vector<8x32xf32>
    %115 = vector.broadcast %10 : vector<1x32xf32> to vector<8x32xf32>
    %116 = arith.mulf %114, %115 : vector<8x32xf32>
    %117 = vector.broadcast %11 : vector<1x32xf32> to vector<8x32xf32>
    %118 = arith.addf %116, %117 : vector<8x32xf32>
    %119 = arith.truncf %118 : vector<8x32xf32> to vector<8x32xbf16>
    %c0_26 = arith.constant 0 : index
    %c0_27 = arith.constant 0 : index
    %c0_28 = arith.constant 0 : index
    %120 = vector.load %arg6[%c0_26, %c0_27, %c0_28] : memref<1x32x64xbf16, #tpu.memory_space<vmem>>, vector<1x32x64xbf16>
    %121 = vector.shape_cast %120 : vector<1x32x64xbf16> to vector<32x64xbf16>
    %cst_29 = arith.constant dense<0.000000e+00> : vector<8x64xf32>
    %122 = tpu.matmul %119, %121, %cst_29 {dimension_numbers = #tpu.dot_dimension_numbers<[1], [0], [0], [1], [0, 0, 1, 1], [], []>} : vector<8x32xbf16>, vector<32x64xbf16>, vector<8x64xf32> -> vector<8x64xf32>
    %c0_30 = arith.constant 0 : index
    %c0_31 = arith.constant 0 : index
    %c0_32 = arith.constant 0 : index
    %123 = vector.load %arg9[%c0_30, %c0_31, %c0_32] : memref<1x1x64xf32, #tpu.memory_space<vmem>>, vector<1x1x64xf32>
    %124 = vector.shape_cast %123 : vector<1x1x64xf32> to vector<1x64xf32>
    %125 = vector.broadcast %124 : vector<1x64xf32> to vector<8x64xf32>
    %126 = arith.addf %122, %125 : vector<8x64xf32>
    %cst_33 = arith.constant 0.000000e+00 : f32
    %127 = vector.broadcast %cst_33 : f32 to vector<8x64xf32>
    %128 = arith.maximumf %126, %127 : vector<8x64xf32>
    %129 = arith.truncf %128 : vector<8x64xf32> to vector<8x64xbf16>
    %c0_34 = arith.constant 0 : index
    %c0_35 = arith.constant 0 : index
    %c0_36 = arith.constant 0 : index
    %130 = vector.load %arg7[%c0_34, %c0_35, %c0_36] : memref<1x64x32xbf16, #tpu.memory_space<vmem>>, vector<1x64x32xbf16>
    %131 = vector.shape_cast %130 : vector<1x64x32xbf16> to vector<64x32xbf16>
    %cst_37 = arith.constant dense<0.000000e+00> : vector<8x32xf32>
    %132 = tpu.matmul %129, %131, %cst_37 {dimension_numbers = #tpu.dot_dimension_numbers<[1], [0], [0], [1], [0, 0, 1, 1], [], []>} : vector<8x64xbf16>, vector<64x32xbf16>, vector<8x32xf32> -> vector<8x32xf32>
    %133 = vector.broadcast %12 : vector<1x32xf32> to vector<8x32xf32>
    %134 = arith.addf %132, %133 : vector<8x32xf32>
    %135 = arith.addf %118, %134 : vector<8x32xf32>
    %cst_38 = arith.constant dense<0.000000e+00> : vector<8xf32>
    %136 = vector.multi_reduction <add>, %135, %cst_38 [1] : vector<8x32xf32> to vector<8xf32>
    %137 = vector.shape_cast %136 : vector<8xf32> to vector<8x1xf32>
    %cst_39 = arith.constant 3.200000e+01 : f32
    %138 = vector.broadcast %cst_39 : f32 to vector<8x1xf32>
    %139 = arith.divf %137, %138 : vector<8x1xf32>
    %140 = vector.broadcast %139 : vector<8x1xf32> to vector<8x32xf32>
    %141 = arith.subf %135, %140 : vector<8x32xf32>
    %142 = arith.mulf %141, %141 : vector<8x32xf32>
    %cst_40 = arith.constant dense<0.000000e+00> : vector<8xf32>
    %143 = vector.multi_reduction <add>, %142, %cst_40 [1] : vector<8x32xf32> to vector<8xf32>
    %144 = vector.shape_cast %143 : vector<8xf32> to vector<8x1xf32>
    %cst_41 = arith.constant 3.200000e+01 : f32
    %145 = vector.broadcast %cst_41 : f32 to vector<8x1xf32>
    %146 = arith.divf %144, %145 : vector<8x1xf32>
    %147 = vector.broadcast %139 : vector<8x1xf32> to vector<8x32xf32>
    %148 = arith.subf %135, %147 : vector<8x32xf32>
    %cst_42 = arith.constant 9.99999974E-6 : f32
    %149 = vector.broadcast %cst_42 : f32 to vector<8x1xf32>
    %150 = arith.addf %146, %149 : vector<8x1xf32>
    %151 = math.rsqrt %150 : vector<8x1xf32>
    %152 = vector.broadcast %151 : vector<8x1xf32> to vector<8x32xf32>
    %153 = arith.mulf %148, %152 : vector<8x32xf32>
    %154 = vector.broadcast %13 : vector<1x32xf32> to vector<8x32xf32>
    %155 = arith.mulf %153, %154 : vector<8x32xf32>
    %156 = vector.broadcast %14 : vector<1x32xf32> to vector<8x32xf32>
    %157 = arith.addf %155, %156 : vector<8x32xf32>
    %c0_43 = arith.constant 0 : index
    %c0_44 = arith.constant 0 : index
    %158 = vector.load %arg12[%c0_43, %c0_44] : memref<8x32xf32, #tpu.memory_space<vmem>>, vector<8x32xf32>
    tpu.vector_store %arg12[%c0_43, %c0_44], %157 {strides = array<i32>} : memref<8x32xf32, #tpu.memory_space<vmem>>, vector<8x32xf32>,
    %c1_i32 = arith.constant 1 : i32
    %159 = arith.cmpi eq, %arg1, %c1_i32 : i32
    %160 = arith.extui %159 : i1 to i32
    %c0_i32_45 = arith.constant 0 : i32
    %161 = arith.cmpi ne, %160, %c0_i32_45 : i32
    scf.if %161 {
      %c0_46 = arith.constant 0 : index
      %c0_47 = arith.constant 0 : index
      %c0_48 = arith.constant 0 : index
      %c0_49 = arith.constant 0 : index
      %162 = vector.load %arg10[%c0_46, %c0_47, %c0_48, %c0_49] : memref<1x1x8x32xf32, #tpu.memory_space<vmem>>, vector<1x1x8x32xf32>
      %163 = vector.shape_cast %162 : vector<1x1x8x32xf32> to vector<8x32xf32>
      %164 = vector.shape_cast %157 : vector<8x32xf32> to vector<1x1x8x32xf32>
      tpu.vector_store %arg10[%c0_46, %c0_47, %c0_48, %c0_49], %164 {strides = array<i32>} : memref<1x1x8x32xf32, #tpu.memory_space<vmem>>, vector<1x1x8x32xf32>,
    } else {
    }
    return
  }
  func.func @transform_0(%arg0: i32, %arg1: i32) -> (i32, i32, i32) {
    %c0_i32 = arith.constant 0 : i32
    %c0_i32_0 = arith.constant 0 : i32
    %c0_i32_1 = arith.constant 0 : i32
    return %arg0, %c0_i32, %c0_i32_0 : i32, i32, i32
  }
  func.func @transform_1(%arg0: i32, %arg1: i32) -> (i32, i32) {
    %c0_i32 = arith.constant 0 : i32
    %c0_i32_0 = arith.constant 0 : i32
    %c0_i32_1 = arith.constant 0 : i32
    return %c0_i32, %c0_i32_0 : i32, i32
  }
  func.func @transform_2(%arg0: i32, %arg1: i32) -> (i32, i32, i32, i32) {
    %c0_i32 = arith.constant 0 : i32
    %c0_i32_0 = arith.constant 0 : i32
    %c0_i32_1 = arith.constant 0 : i32
    %c0_i32_2 = arith.constant 0 : i32
    return %arg1, %c0_i32, %c0_i32_0, %c0_i32_1 : i32, i32, i32, i32
  }
  func.func @transform_3(%arg0: i32, %arg1: i32) -> (i32, i32, i32) {
    %c0_i32 = arith.constant 0 : i32
    %c0_i32_0 = arith.constant 0 : i32
    %c0_i32_1 = arith.constant 0 : i32
    return %arg1, %c0_i32, %c0_i32_0 : i32, i32, i32
  }
  func.func @transform_4(%arg0: i32, %arg1: i32) -> (i32, i32, i32) {
    %c0_i32 = arith.constant 0 : i32
    %c0_i32_0 = arith.constant 0 : i32
    %c0_i32_1 = arith.constant 0 : i32
    return %arg1, %c0_i32, %c0_i32_0 : i32, i32, i32
  }
  func.func @transform_5(%arg0: i32, %arg1: i32) -> (i32, i32, i32) {
    %c0_i32 = arith.constant 0 : i32
    %c0_i32_0 = arith.constant 0 : i32
    %c0_i32_1 = arith.constant 0 : i32
    return %arg1, %c0_i32, %c0_i32_0 : i32, i32, i32
  }
  func.func @transform_6(%arg0: i32, %arg1: i32) -> (i32, i32, i32) {
    %c0_i32 = arith.constant 0 : i32
    %c0_i32_0 = arith.constant 0 : i32
    %c0_i32_1 = arith.constant 0 : i32
    return %arg1, %c0_i32, %c0_i32_0 : i32, i32, i32
  }
  func.func @transform_7(%arg0: i32, %arg1: i32) -> (i32, i32, i32) {
    %c0_i32 = arith.constant 0 : i32
    %c0_i32_0 = arith.constant 0 : i32
    %c0_i32_1 = arith.constant 0 : i32
    return %arg1, %c0_i32, %c0_i32_0 : i32, i32, i32
  }
  func.func @transform_8(%arg0: i32, %arg1: i32) -> (i32, i32, i32, i32) {
    %c1_i32 = arith.constant 1 : i32
    %0 = arith.cmpi sge, %arg1, %c1_i32 : i32
    %1 = arith.extui %0 : i1 to i32
    %c1_i32_0 = arith.constant 1 : i32
    %2 = arith.subi %1, %c1_i32_0 : i32
    %c0_i32 = arith.constant 0 : i32
    %3 = arith.maxsi %2, %c0_i32 : i32
    %c0_i32_1 = arith.constant 0 : i32
    %c0_i32_2 = arith.constant 0 : i32
    %c0_i32_3 = arith.constant 0 : i32
    return %3, %arg0, %c0_i32_1, %c0_i32_2 : i32, i32, i32, i32
  }
  func.func @transform_9(%arg0: i32, %arg1: i32) -> (i32, i32, i32) {
    %c0_i32 = arith.constant 0 : i32
    %c0_i32_0 = arith.constant 0 : i32
    %c0_i32_1 = arith.constant 0 : i32
    return %arg0, %c0_i32, %c0_i32_0 : i32, i32, i32
  }
}

</mosaic_0001>

<llo_original>
// kernel: tpu_custom_call.1
$region0: #{tpu_custom_call.1}
  #allocation0 [shape = 'u32[]', space=smem, size = 0x4, offset = 0x4, fixed_abs, tag = 'smem constant byte address 0x4 - core index']
  #allocation1 [shape = 'u32[144,128]{1,0:T(1,128)}', space=vmem, size = 0x12000, scoped, tag = 'internal scratch']
  #allocation2 [shape = 'f32[8,32]{1,0:T(8,128)}', space=vmem, size = 0x1000, scoped, tag = 'scratch operand']
  %s0 = inlined_call_operand.hbm [shape: f32[2,8,32], index: 0, kind: input, shape index: {}]
  %s1 = inlined_call_operand.hbm [shape: f32[2,32], index: 1, kind: input, shape index: {}]
  %s2 = inlined_call_operand.vmem [shape: bf16[3,3,32,32], index: 2, kind: input, shape index: {}]
  %s3 = inlined_call_operand.hbm [shape: bf16[3,32,32], index: 3, kind: input, shape index: {}]
  %s4 = inlined_call_operand.hbm [shape: bf16[3,32,64], index: 4, kind: input, shape index: {}]
  %s5 = inlined_call_operand.vmem [shape: bf16[3,64,32], index: 5, kind: input, shape index: {}]
  %s6 = inlined_call_operand.hbm [shape: f32[3,16,32], index: 6, kind: input, shape index: {}]
  %s7 = inlined_call_operand.vmem [shape: f32[3,1,64], index: 7, kind: input, shape index: {}]
  %s8 = inlined_call_operand.hbm [shape: f32[1,2,8,32], index: 8, kind: output, shape index: {0}]
  %s9 = inlined_call_operand.hbm [shape: f32[2,8,8], index: 9, kind: output, shape index: {1}]
  %10 = xla_tuple %s8, %s9
  %s11 = sld [smem:[#allocation0]]
  $region105: #{tpu_custom_call.1} parent=0
    _
  %s13 = ssub.s32 1, %s11
  %s14 = scalar_select 0, %s13, %s11
  $region1: #{tpu_custom_call.1} parent=0
    #allocation3 [shape = 'u8[8192]{0}', space=vmem, size = 0x2000, scoped, tag = 'input window, operand 0']
    #allocation4 [shape = 's32[2]{0}', space=sflag, size = 0x8, scoped, tag = 'scoped memory for tpu_custom_call.1']
    #allocation5 [shape = 's32[2]{0}', space=sflag, size = 0x8, scoped, tag = 'scoped memory for tpu_custom_call.1']
    #allocation6 [shape = 'u8[1024]{0}', space=vmem, size = 0x400, scoped, tag = 'input window, operand 1, single buffered']
    #allocation7 [shape = 's32[1]{0}', space=sflag, size = 0x4, scoped, tag = 'scoped memory for tpu_custom_call.1']
    #allocation8 [shape = 'u8[16384]{0}', space=vmem, size = 0x4000, scoped, tag = 'input window, operand 3']
    #allocation9 [shape = 'u8[16384]{0}', space=vmem, size = 0x4000, scoped, tag = 'input window, operand 4']
    #allocation10 [shape = 'u8[16384]{0}', space=vmem, size = 0x4000, scoped, tag = 'input window, operand 6']
    #allocation11 [shape = 'u8[8192]{0}', space=vmem, size = 0x2000, scoped, tag = 'output window, operand 0']
    #allocation12 [shape = 'u8[8192]{0}', space=vmem, size = 0x2000, scoped, tag = 'output window, operand 1']
    #allocation13 [shape = 's32[2]{0}', space=sflag, size = 0x8, scoped, tag = 'scoped memory for tpu_custom_call.1']
    %15 = vsyncpa [#allocation4], 0
    %s16 = scalar_lea.sflag [#allocation4], 1
    %17 = vsyncpa %s16, 0
    %18 = vsyncpa [#allocation7], 0
    %19 = vsyncpa [#allocation5], 0
    %s20 = scalar_lea.sflag [#allocation5], 1
    %21 = vsyncpa %s20, 0
    %22 = vsyncpa [#allocation13], 0
    %s23 = scalar_lea.sflag [#allocation13], 1
    %24 = vsyncpa %s23, 0
    loop: start=0, step=1, limit=8
    $region2: #{tpu_custom_call.1} parent=1 // loop_pre_header
      _
    $region3: #{tpu_custom_call.1} parent=1 // loop_header
      %s26 = sphi 0, %s30
      %p27 = scmp.ge.s32.totalorder %s26, 8
      %s33 = sphi 0, %s45
      %s34 = sphi 0, %s41
      %s35 = sphi 0, %s33
      %s36 = sphi 0, %s34
      %s37 = sphi 0, %s35
      %s38 = sphi 0, %s36
      %s48 = sphi 0, %s50
      %s51 = sphi 0, %s48
      %s52 = sphi 0, %s51
      %s68 = sphi 0, %s52
      %s72 = sphi 0, %s72
      %s74 = sphi 0, %s72
      %s75 = sphi 0, %s74
      %s89 = sphi 0, %s75
      %s95 = sphi 0, %s97
      %s98 = sphi 0, %s95
      %s99 = sphi 0, %s98
      %s115 = sphi 0, %s99
      %s121 = sphi 0, %s123
      %s124 = sphi 0, %s121
      %s125 = sphi 0, %s124
      %s141 = sphi 0, %s125
      %s147 = sphi 0, %s149
      %s150 = sphi 0, %s147
      %s151 = sphi 0, %s150
      %s167 = sphi 0, %s151
      %s173 = sphi 0, %s175
      %s176 = sphi 0, %s173
      %s177 = sphi 0, %s176
      %s193 = sphi 0, %s177
      %s199 = sphi 0, %s201
      %s202 = sphi 0, %s199
      %s203 = sphi 0, %s202
      %s219 = sphi 0, %s203
      %s225 = sphi 0, %s227
      %s228 = sphi 0, %s225
      %s229 = sphi 0, %s228
      %s245 = sphi 0, %s229
      %s263 = sphi 0, %s265
      %s266 = sphi 0, %s263
      %s267 = sphi 0, %s266
      %s283 = sphi 0, %s267
      %s289 = sphi 0, %s291
      %s292 = sphi 0, %s289
      %s293 = sphi 0, %s292
      %s309 = sphi 0, %s293
    $region4: #{tpu_custom_call.1} parent=1 // loop_header_branch
      %29 = sbr.rel (%p27) target = $region8
    $region5: #{tpu_custom_call.1} parent=1 // loop_body
      %s31 = ssub.s32 %s26, 1
      %s32 = ssub.s32 %s26, 2
      %s39 = sadd.s32 1, %s34
      %p40 = scmp.ge.s32.totalorder %s39, 3
      %s41 = scalar_select %p40, 0, %s39
      %s42 = sadd.s32 1, %s33
      %s43 = scalar_select %p40, %s42, %s33
      %p44 = scmp.ge.s32.totalorder %s43, 2
      %s45 = scalar_select %p44, 0, %s43
      %s46 = ssub.s32 %s33, %s45
      %p47 = scmp.eq.s32.totalorder %s46, 0
      %s49 = sadd.s32 %s48, 1
      %s50 = scalar_select %p47, %s48, %s49
      %p53 = pneg %p47
      %p54 = scmp.eq.s32.totalorder %s26, 5
      %p55 = por %p53, %p54
      %p56 = scmp.ne.s32.totalorder %s48, %s51
      %p57 = scmp.eq.s32.totalorder %s26, 0
      %p58 = por %p56, %p57
      %p59 = scmp.ne.s32.totalorder %s48, %s51
      %p60 = scmp.eq.s32.totalorder %s31, 5
      %p61 = por %p59, %p60
      %p62 = scmp.ne.s32.totalorder %s51, %s52
      %p63 = scmp.eq.s32.totalorder %s31, 0
      %p64 = por %p62, %p63
      %p65 = scmp.ne.s32.totalorder %s51, %s52
      %p66 = scmp.eq.s32.totalorder %s32, 5
      %p67 = por %p65, %p66
      %p69 = scmp.ne.s32.totalorder %s52, %s68
      %p70 = scmp.eq.s32.totalorder %s32, 0
      %p71 = por %p69, %p70
      %s73 = sadd.s32 %s72, 1
      %p76 = scmp.eq.s32.totalorder %s26, 5
      %p77 = scmp.ne.s32.totalorder %s72, %s74
      %p78 = scmp.eq.s32.totalorder %s26, 0
      %p79 = por %p77, %p78
      %p80 = scmp.ne.s32.totalorder %s72, %s74
      %p81 = scmp.eq.s32.totalorder %s31, 5
      %p82 = por %p80, %p81
      %p83 = scmp.ne.s32.totalorder %s74, %s75
      %p84 = scmp.eq.s32.totalorder %s31, 0
      %p85 = por %p83, %p84
      %p86 = scmp.ne.s32.totalorder %s74, %s75
      %p87 = scmp.eq.s32.totalorder %s32, 5
      %p88 = por %p86, %p87
      %p90 = scmp.ne.s32.totalorder %s75, %s89
      %p91 = scmp.eq.s32.totalorder %s32, 0
      %p92 = por %p90, %p91
      %s93 = ssub.s32 %s34, %s41
      %p94 = scmp.eq.s32.totalorder %s93, 0
      %s96 = sadd.s32 %s95, 1
      %s97 = scalar_select %p94, %s95, %s96
      %p100 = pneg %p94
      %p101 = scmp.eq.s32.totalorder %s26, 5
      %p102 = por %p100, %p101
      %p103 = scmp.ne.s32.totalorder %s95, %s98
      %p104 = scmp.eq.s32.totalorder %s26, 0
      %p105 = por %p103, %p104
      %p106 = scmp.ne.s32.totalorder %s95, %s98
      %p107 = scmp.eq.s32.totalorder %s31, 5
      %p108 = por %p106, %p107
      %p109 = scmp.ne.s32.totalorder %s98, %s99
      %p110 = scmp.eq.s32.totalorder %s31, 0
      %p111 = por %p109, %p110
      %p112 = scmp.ne.s32.totalorder %s98, %s99
      %p113 = scmp.eq.s32.totalorder %s32, 5
      %p114 = por %p112, %p113
      %p116 = scmp.ne.s32.totalorder %s99, %s115
      %p117 = scmp.eq.s32.totalorder %s32, 0
      %p118 = por %p116, %p117
      %s119 = ssub.s32 %s34, %s41
      %p120 = scmp.eq.s32.totalorder %s119, 0
      %s122 = sadd.s32 %s121, 1
      %s123 = scalar_select %p120, %s121, %s122
      %p126 = pneg %p120
      %p127 = scmp.eq.s32.totalorder %s26, 5
      %p128 = por %p126, %p127
      %p129 = scmp.ne.s32.totalorder %s121, %s124
      %p130 = scmp.eq.s32.totalorder %s26, 0
      %p131 = por %p129, %p130
      %p132 = scmp.ne.s32.totalorder %s121, %s124
      %p133 = scmp.eq.s32.totalorder %s31, 5
      %p134 = por %p132, %p133
      %p135 = scmp.ne.s32.totalorder %s124, %s125
      %p136 = scmp.eq.s32.totalorder %s31, 0
      %p137 = por %p135, %p136
      %p138 = scmp.ne.s32.totalorder %s124, %s125
      %p139 = scmp.eq.s32.totalorder %s32, 5
      %p140 = por %p138, %p139
      %p142 = scmp.ne.s32.totalorder %s125, %s141
      %p143 = scmp.eq.s32.totalorder %s32, 0
      %p144 = por %p142, %p143
      %s145 = ssub.s32 %s34, %s41
      %p146 = scmp.eq.s32.totalorder %s145, 0
      %s148 = sadd.s32 %s147, 1
      %s149 = scalar_select %p146, %s147, %s148
      %p152 = pneg %p146
      %p153 = scmp.eq.s32.totalorder %s26, 5
      %p154 = por %p152, %p153
      %p155 = scmp.ne.s32.totalorder %s147, %s150
      %p156 = scmp.eq.s32.totalorder %s26, 0
      %p157 = por %p155, %p156
      %p158 = scmp.ne.s32.totalorder %s147, %s150
      %p159 = scmp.eq.s32.totalorder %s31, 5
      %p160 = por %p158, %p159
      %p161 = scmp.ne.s32.totalorder %s150, %s151
      %p162 = scmp.eq.s32.totalorder %s31, 0
      %p163 = por %p161, %p162
      %p164 = scmp.ne.s32.totalorder %s150, %s151
      %p165 = scmp.eq.s32.totalorder %s32, 5
      %p166 = por %p164, %p165
      %p168 = scmp.ne.s32.totalorder %s151, %s167
      %p169 = scmp.eq.s32.totalorder %s32, 0
      %p170 = por %p168, %p169
      %s171 = ssub.s32 %s34, %s41
      %p172 = scmp.eq.s32.totalorder %s171, 0
      %s174 = sadd.s32 %s173, 1
      %s175 = scalar_select %p172, %s173, %s174
      %p178 = pneg %p172
      %p179 = scmp.eq.s32.totalorder %s26, 5
      %p180 = por %p178, %p179
      %p181 = scmp.ne.s32.totalorder %s173, %s176
      %p182 = scmp.eq.s32.totalorder %s26, 0
      %p183 = por %p181, %p182
      %p184 = scmp.ne.s32.totalorder %s173, %s176
      %p185 = scmp.eq.s32.totalorder %s31, 5
      %p186 = por %p184, %p185
      %p187 = scmp.ne.s32.totalorder %s176, %s177
      %p188 = scmp.eq.s32.totalorder %s31, 0
      %p189 = por %p187, %p188
      %p190 = scmp.ne.s32.totalorder %s176, %s177
      %p191 = scmp.eq.s32.totalorder %s32, 5
      %p192 = por %p190, %p191
      %p194 = scmp.ne.s32.totalorder %s177, %s193
      %p195 = scmp.eq.s32.totalorder %s32, 0
      %p196 = por %p194, %p195
      %s197 = ssub.s32 %s34, %s41
      %p198 = scmp.eq.s32.totalorder %s197, 0
      %s200 = sadd.s32 %s199, 1
      %s201 = scalar_select %p198, %s199, %s200
      %p204 = pneg %p198
      %p205 = scmp.eq.s32.totalorder %s26, 5
      %p206 = por %p204, %p205
      %p207 = scmp.ne.s32.totalorder %s199, %s202
      %p208 = scmp.eq.s32.totalorder %s26, 0
      %p209 = por %p207, %p208
      %p210 = scmp.ne.s32.totalorder %s199, %s202
      %p211 = scmp.eq.s32.totalorder %s31, 5
      %p212 = por %p210, %p211
      %p213 = scmp.ne.s32.totalorder %s202, %s203
      %p214 = scmp.eq.s32.totalorder %s31, 0
      %p215 = por %p213, %p214
      %p216 = scmp.ne.s32.totalorder %s202, %s203
      %p217 = scmp.eq.s32.totalorder %s32, 5
      %p218 = por %p216, %p217
      %p220 = scmp.ne.s32.totalorder %s203, %s219
      %p221 = scmp.eq.s32.totalorder %s32, 0
      %p222 = por %p220, %p221
      %s223 = ssub.s32 %s34, %s41
      %p224 = scmp.eq.s32.totalorder %s223, 0
      %s226 = sadd.s32 %s225, 1
      %s227 = scalar_select %p224, %s225, %s226
      %p230 = pneg %p224
      %p231 = scmp.eq.s32.totalorder %s26, 5
      %p232 = por %p230, %p231
      %p233 = scmp.ne.s32.totalorder %s225, %s228
      %p234 = scmp.eq.s32.totalorder %s26, 0
      %p235 = por %p233, %p234
      %p236 = scmp.ne.s32.totalorder %s225, %s228
      %p237 = scmp.eq.s32.totalorder %s31, 5
      %p238 = por %p236, %p237
      %p239 = scmp.ne.s32.totalorder %s228, %s229
      %p240 = scmp.eq.s32.totalorder %s31, 0
      %p241 = por %p239, %p240
      %p242 = scmp.ne.s32.totalorder %s228, %s229
      %p243 = scmp.eq.s32.totalorder %s32, 5
      %p244 = por %p242, %p243
      %p246 = scmp.ne.s32.totalorder %s229, %s245
      %p247 = scmp.eq.s32.totalorder %s32, 0
      %p248 = por %p246, %p247
      %p249 = scmp.ge.s32.totalorder %s34, 1
      %s250 = scalar_select %p249, 1, 0
      %s251 = ssub.s32 %s250, 1
      %p252 = scmp.gt.s32.totalorder %s251, 0
      %s253 = scalar_select %p252, %s251, 0
      %p254 = scmp.ge.s32.totalorder %s41, 1
      %s255 = scalar_select %p254, 1, 0
      %s256 = ssub.s32 %s255, 1
      %p257 = scmp.gt.s32.totalorder %s256, 0
      %s258 = scalar_select %p257, %s256, 0
      %s259 = ssub.s32 %s253, %s258
      %s260 = ssub.s32 %s33, %s45
      %s261 = sor.u32 %s259, %s260
      %p262 = scmp.eq.s32.totalorder %s261, 0
      %s264 = sadd.s32 %s263, 1
      %s265 = scalar_select %p262, %s263, %s264
      %p268 = pneg %p262
      %p269 = scmp.eq.s32.totalorder %s26, 5
      %p270 = por %p268, %p269
      %p271 = scmp.ne.s32.totalorder %s263, %s266
      %p272 = scmp.eq.s32.totalorder %s26, 0
      %p273 = por %p271, %p272
      %p274 = scmp.ne.s32.totalorder %s263, %s266
      %p275 = scmp.eq.s32.totalorder %s31, 5
      %p276 = por %p274, %p275
      %p277 = scmp.ne.s32.totalorder %s266, %s267
      %p278 = scmp.eq.s32.totalorder %s31, 0
      %p279 = por %p277, %p278
      %p280 = scmp.ne.s32.totalorder %s266, %s267
      %p281 = scmp.eq.s32.totalorder %s32, 5
      %p282 = por %p280, %p281
      %p284 = scmp.ne.s32.totalorder %s267, %s283
      %p285 = scmp.eq.s32.totalorder %s32, 0
      %p286 = por %p284, %p285
      %s287 = ssub.s32 %s33, %s45
      %p288 = scmp.eq.s32.totalorder %s287, 0
      %s290 = sadd.s32 %s289, 1
      %s291 = scalar_select %p288, %s289, %s290
      %p294 = pneg %p288
      %p295 = scmp.eq.s32.totalorder %s26, 5
      %p296 = por %p294, %p295
      %p297 = scmp.ne.s32.totalorder %s289, %s292
      %p298 = scmp.eq.s32.totalorder %s26, 0
      %p299 = por %p297, %p298
      %p300 = scmp.ne.s32.totalorder %s289, %s292
      %p301 = scmp.eq.s32.totalorder %s31, 5
      %p302 = por %p300, %p301
      %p303 = scmp.ne.s32.totalorder %s292, %s293
      %p304 = scmp.eq.s32.totalorder %s31, 0
      %p305 = por %p303, %p304
      %p306 = scmp.ne.s32.totalorder %s292, %s293
      %p307 = scmp.eq.s32.totalorder %s32, 5
      %p308 = por %p306, %p307
      %p310 = scmp.ne.s32.totalorder %s293, %s309
      %p311 = scmp.eq.s32.totalorder %s32, 0
      %p312 = por %p310, %p311
      %p313 = scmp.le.s32.totalorder 1, %s26
      %p314 = scmp.lt.s32.totalorder %s26, 7
      %p315 = pnand %p313, %p314
      %p316 = pneg %p315
      // Predicated region
      $region9: #{tpu_custom_call.1} parent=5 // pred_check
        _
      $region10: #{tpu_custom_call.1} parent=5 // pred_check_branch
        %318 = sbr.rel (%p315) target = $region12
      $region11: #{tpu_custom_call.1} parent=5 // pred_region
        %s319 = ssub.s32 %s26, 1
        // Predicated region
        $region13: #{tpu_custom_call.1} parent=11 // pred_check
          %p320 = pneg %p85
        $region14: #{tpu_custom_call.1} parent=11 // pred_check_branch
          %322 = sbr.rel (%p320) target = $region16
        $region15: #{tpu_custom_call.1} parent=11 // pred_region
          %s324 = ssub.s32 32, 32
          %325 = vsyncadd [#allocation7], %s324
          %s327 = sshll.u32 [#allocation6], 4
          %s328 = int_to_ptr.vmem [resolvable:$true] %s327
          %330 = dma.hbm_to_vmem [thread:$0]  %s1, 32, %s328, [#allocation7]
        $region16: #{tpu_custom_call.1} parent=11 // pred_fallthru
          _
      $region12: #{tpu_custom_call.1} parent=5 // pred_fallthru
        _
      %p331 = scmp.lt.s32.totalorder %s26, 6
      // Predicated region
      $region17: #{tpu_custom_call.1} parent=5 // pred_check
        %p332 = pneg %p331
      $region18: #{tpu_custom_call.1} parent=5 // pred_check_branch
        %334 = sbr.rel (%p332) target = $region20
      $region19: #{tpu_custom_call.1} parent=5 // pred_region
        // Predicated region
        $region21: #{tpu_custom_call.1} parent=19 // pred_check
          %p335 = pneg %p58
        $region22: #{tpu_custom_call.1} parent=19 // pred_check_branch
          %337 = sbr.rel (%p335) target = $region24
        $region23: #{tpu_custom_call.1} parent=19 // pred_region
          %s338 = sand.u32 %s26, 1
          %s339 = scalar_lea.sflag [#allocation4], %s338
          %s340 = sand.u32 %s48, 1
          %s341 = smul.addr %s340, 8
          %s342 = scalar_lea.vmem [#allocation3], %s341
          %s344 = ssub.s32 128, 128
          %345 = vsyncadd %s339, %s344
          %s346 = smul.addr %s33, 128
          %s347 = scalar_lea.hbm %s0, %s346
          %s349 = sshll.u32 %s342, 4
          %s350 = int_to_ptr.vmem [resolvable:$true] %s349
          %352 = dma.hbm_to_vmem [thread:$0]  %s347, 128, %s350, %s339
        $region24: #{tpu_custom_call.1} parent=19 // pred_fallthru
          _
        // Predicated region
        $region25: #{tpu_custom_call.1} parent=19 // pred_check
          %p353 = pneg %p105
        $region26: #{tpu_custom_call.1} parent=19 // pred_check_branch
          %355 = sbr.rel (%p353) target = $region28
        $region27: #{tpu_custom_call.1} parent=19 // pred_region
          %p356 = scmp.lt.s32.totalorder %s34, 2
          %s357 = scalar_select %p356, %s34, 2
          %s358 = smul.addr %s357, 12
          %s359 = smul.addr %s358, 4
          %s360 = scalar_lea.vmem %s2, %s359
        $region28: #{tpu_custom_call.1} parent=19 // pred_fallthru
          _
        // Predicated region
        $region29: #{tpu_custom_call.1} parent=19 // pred_check
          %p361 = pneg %p131
        $region30: #{tpu_custom_call.1} parent=19 // pred_check_branch
          %363 = sbr.rel (%p361) target = $region32
        $region31: #{tpu_custom_call.1} parent=19 // pred_region
          %s364 = sand.u32 %s26, 1
          %s365 = scalar_lea.sflag [#allocation4], %s364
          %s366 = sand.u32 %s121, 1
          %s367 = smul.addr %s366, 16
          %s368 = scalar_lea.vmem [#allocation8], %s367
          %s370 = ssub.s32 256, 256
          %371 = vsyncadd %s365, %s370
          %s372 = smul.addr %s34, 4
          %s373 = smul.addr %s372, 64
          %s374 = scalar_lea.hbm %s3, %s373
          %s375 = sshll.u32 %s368, 4
          %s376 = int_to_ptr.vmem [resolvable:$true] %s375
          %381 = dma.hbm_to_vmem [thread:$0]  %s374, 256, %s376, %s365, 64, 64, 4
        $region32: #{tpu_custom_call.1} parent=19 // pred_fallthru
          _
        // Predicated region
        $region33: #{tpu_custom_call.1} parent=19 // pred_check
          %p382 = pneg %p157
        $region34: #{tpu_custom_call.1} parent=19 // pred_check_branch
          %384 = sbr.rel (%p382) target = $region36
        $region35: #{tpu_custom_call.1} parent=19 // pred_region
          %s385 = sand.u32 %s26, 1
          %s386 = scalar_lea.sflag [#allocation4], %s385
          %s387 = sand.u32 %s147, 1
          %s388 = smul.addr %s387, 16
          %s389 = scalar_lea.vmem [#allocation9], %s388
          %s391 = ssub.s32 256, 256
          %392 = vsyncadd %s386, %s391
          %s393 = smul.addr %s34, 4
          %s394 = smul.addr %s393, 64
          %s395 = scalar_lea.hbm %s4, %s394
          %s396 = sshll.u32 %s389, 4
          %s397 = int_to_ptr.vmem [resolvable:$true] %s396
          %402 = dma.hbm_to_vmem [thread:$0]  %s395, 256, %s397, %s386, 64, 64, 4
        $region36: #{tpu_custom_call.1} parent=19 // pred_fallthru
          _
        // Predicated region
        $region37: #{tpu_custom_call.1} parent=19 // pred_check
          %p403 = pneg %p183
        $region38: #{tpu_custom_call.1} parent=19 // pred_check_branch
          %405 = sbr.rel (%p403) target = $region40
        $region39: #{tpu_custom_call.1} parent=19 // pred_region
          %p406 = scmp.lt.s32.totalorder %s34, 2
          %s407 = scalar_select %p406, %s34, 2
          %s408 = smul.addr %s407, 8
          %s409 = smul.addr %s408, 4
          %s410 = scalar_lea.vmem %s5, %s409
        $region40: #{tpu_custom_call.1} parent=19 // pred_fallthru
          _
        // Predicated region
        $region41: #{tpu_custom_call.1} parent=19 // pred_check
          %p411 = pneg %p209
        $region42: #{tpu_custom_call.1} parent=19 // pred_check_branch
          %413 = sbr.rel (%p411) target = $region44
        $region43: #{tpu_custom_call.1} parent=19 // pred_region
          %s414 = sand.u32 %s26, 1
          %s415 = scalar_lea.sflag [#allocation4], %s414
          %s416 = sand.u32 %s199, 1
          %s417 = smul.addr %s416, 16
          %s418 = scalar_lea.vmem [#allocation10], %s417
          %s420 = ssub.s32 256, 256
          %421 = vsyncadd %s415, %s420
          %s422 = smul.addr %s34, 2
          %s423 = smul.addr %s422, 128
          %s424 = scalar_lea.hbm %s6, %s423
          %s425 = sshll.u32 %s418, 4
          %s426 = int_to_ptr.vmem [resolvable:$true] %s425
          %431 = dma.hbm_to_vmem [thread:$0]  %s424, 256, %s426, %s415, 128, 128, 8
        $region44: #{tpu_custom_call.1} parent=19 // pred_fallthru
          _
        // Predicated region
        $region45: #{tpu_custom_call.1} parent=19 // pred_check
          %p432 = pneg %p235
        $region46: #{tpu_custom_call.1} parent=19 // pred_check_branch
          %434 = sbr.rel (%p432) target = $region48
        $region47: #{tpu_custom_call.1} parent=19 // pred_region
          %p435 = scmp.lt.s32.totalorder %s34, 2
          %s436 = scalar_select %p435, %s34, 2
          %s437 = scalar_lea.vmem %s7, %s436
        $region48: #{tpu_custom_call.1} parent=19 // pred_fallthru
          _
      $region20: #{tpu_custom_call.1} parent=5 // pred_fallthru
        _
      %p438 = scmp.le.s32.totalorder 1, %s26
      %p439 = scmp.lt.s32.totalorder %s26, 7
      %p440 = pnand %p438, %p439
      %p441 = pneg %p440
      // Predicated region
      $region49: #{tpu_custom_call.1} parent=5 // pred_check
        _
      $region50: #{tpu_custom_call.1} parent=5 // pred_check_branch
        %443 = sbr.rel (%p440) target = $region52
      $region51: #{tpu_custom_call.1} parent=5 // pred_region
        %s444 = ssub.s32 %s26, 1
        %s445 = sand.u32 %s31, 1
        %s446 = scalar_lea.sflag [#allocation4], %s445
        %s447 = sand.u32 %s51, 1
        %s448 = smul.addr %s447, 8
        %s449 = scalar_lea.vmem [#allocation3], %s448
        // Predicated region
        $region53: #{tpu_custom_call.1} parent=51 // pred_check
          %p450 = pneg %p64
        $region54: #{tpu_custom_call.1} parent=51 // pred_check_branch
          %452 = sbr.rel (%p450) target = $region56
        $region55: #{tpu_custom_call.1} parent=51 // pred_region
          %453 = dma.done %s446, 128
        $region56: #{tpu_custom_call.1} parent=51 // pred_fallthru
          _
        // Predicated region
        $region57: #{tpu_custom_call.1} parent=51 // pred_check
          %p454 = pneg %p85
        $region58: #{tpu_custom_call.1} parent=51 // pred_check_branch
          %456 = sbr.rel (%p454) target = $region60
        $region59: #{tpu_custom_call.1} parent=51 // pred_region
          %457 = dma.done [#allocation7], 32
        $region60: #{tpu_custom_call.1} parent=51 // pred_fallthru
          _
        %s458 = sand.u32 %s31, 1
        %s459 = scalar_lea.sflag [#allocation4], %s458
        %s460 = sand.u32 %s124, 1
        %s461 = smul.addr %s460, 16
        %s462 = scalar_lea.vmem [#allocation8], %s461
        // Predicated region
        $region61: #{tpu_custom_call.1} parent=51 // pred_check
          %p463 = pneg %p137
        $region62: #{tpu_custom_call.1} parent=51 // pred_check_branch
          %465 = sbr.rel (%p463) target = $region64
        $region63: #{tpu_custom_call.1} parent=51 // pred_region
          %466 = dma.done %s459, 256
        $region64: #{tpu_custom_call.1} parent=51 // pred_fallthru
          _
        %s467 = sand.u32 %s31, 1
        %s468 = scalar_lea.sflag [#allocation4], %s467
        %s469 = sand.u32 %s150, 1
        %s470 = smul.addr %s469, 16
        %s471 = scalar_lea.vmem [#allocation9], %s470
        // Predicated region
        $region65: #{tpu_custom_call.1} parent=51 // pred_check
          %p472 = pneg %p163
        $region66: #{tpu_custom_call.1} parent=51 // pred_check_branch
          %474 = sbr.rel (%p472) target = $region68
        $region67: #{tpu_custom_call.1} parent=51 // pred_region
          %475 = dma.done %s468, 256
        $region68: #{tpu_custom_call.1} parent=51 // pred_fallthru
          _
        %s476 = sand.u32 %s31, 1
        %s477 = scalar_lea.sflag [#allocation4], %s476
        %s478 = sand.u32 %s202, 1
        %s479 = smul.addr %s478, 16
        %s480 = scalar_lea.vmem [#allocation10], %s479
        // Predicated region
        $region69: #{tpu_custom_call.1} parent=51 // pred_check
          %p481 = pneg %p215
        $region70: #{tpu_custom_call.1} parent=51 // pred_check_branch
          %483 = sbr.rel (%p481) target = $region72
        $region71: #{tpu_custom_call.1} parent=51 // pred_region
          %484 = dma.done %s477, 256
        $region72: #{tpu_custom_call.1} parent=51 // pred_fallthru
          _
        %s485 = sand.u32 %s31, 1
        %s486 = scalar_lea.sflag [#allocation4], %s485
        %s487 = sand.u32 %s51, 1
        %s488 = smul.addr %s487, 8
        %s489 = scalar_lea.vmem [#allocation3], %s488
        %p490 = pneg %p64
        %p491 = pneg %p61
        %p492 = pneg %p85
        %p493 = pneg %p82
        %p494 = scmp.lt.s32.totalorder %s36, 2
        %s495 = scalar_select %p494, %s36, 2
        %s496 = smul.addr %s495, 12
        %s497 = smul.addr %s496, 4
        %s498 = scalar_lea.vmem %s2, %s497
        %p499 = pneg %p111
        %p500 = pneg %p108
        %s501 = sand.u32 %s31, 1
        %s502 = scalar_lea.sflag [#allocation4], %s501
        %s503 = sand.u32 %s124, 1
        %s504 = smul.addr %s503, 16
        %s505 = scalar_lea.vmem [#allocation8], %s504
        %p506 = pneg %p137
        %p507 = pneg %p134
        %s508 = sand.u32 %s31, 1
        %s509 = scalar_lea.sflag [#allocation4], %s508
        %s510 = sand.u32 %s150, 1
        %s511 = smul.addr %s510, 16
        %s512 = scalar_lea.vmem [#allocation9], %s511
        %p513 = pneg %p163
        %p514 = pneg %p160
        %p515 = scmp.lt.s32.totalorder %s36, 2
        %s516 = scalar_select %p515, %s36, 2
        %s517 = smul.addr %s516, 8
        %s518 = smul.addr %s517, 4
        %s519 = scalar_lea.vmem %s5, %s518
        %p520 = pneg %p189
        %p521 = pneg %p186
        %s522 = sand.u32 %s31, 1
        %s523 = scalar_lea.sflag [#allocation4], %s522
        %s524 = sand.u32 %s202, 1
        %s525 = smul.addr %s524, 16
        %s526 = scalar_lea.vmem [#allocation10], %s525
        %p527 = pneg %p215
        %p528 = pneg %p212
        %p529 = scmp.lt.s32.totalorder %s36, 2
        %s530 = scalar_select %p529, %s36, 2
        %s531 = scalar_lea.vmem %s7, %s530
        %p532 = pneg %p241
        %p533 = pneg %p238
        %p534 = pneg %p279
        %p535 = pneg %p276
        %s536 = sand.u32 %s266, 1
        %s537 = scalar_lea.sflag [#allocation5], %s536
        %s538 = sand.u32 %s266, 1
        %s539 = smul.addr %s538, 8
        %s540 = scalar_lea.vmem [#allocation11], %s539
        %p541 = pneg %p305
        %p542 = pneg %p302
        %s543 = sand.u32 %s292, 1
        %s544 = scalar_lea.sflag [#allocation13], %s543
        %s545 = sand.u32 %s292, 1
        %s546 = smul.addr %s545, 8
        %s547 = scalar_lea.vmem [#allocation12], %s546
        %p548 = scmp.lt.s32.totalorder %s36, 2
        %s549 = scalar_select %p548, %s36, 2
        %s550 = smul.addr %s549, 12
        %s551 = smul.addr %s550, 4
        %s552 = scalar_lea.vmem %s2, %s551
        %p553 = scmp.lt.s32.totalorder %s36, 2
        %s554 = scalar_select %p553, %s36, 2
        %s555 = smul.addr %s554, 8
        %s556 = smul.addr %s555, 4
        %s557 = scalar_lea.vmem %s5, %s556
        %p558 = scmp.lt.s32.totalorder %s36, 2
        %s559 = scalar_select %p558, %s36, 2
        %s560 = scalar_lea.vmem %s7, %s559
        %p561 = scmp.ge.s32.totalorder %s36, 1
        %s562 = scalar_select %p561, 1, 0
        %s563 = ssub.s32 %s562, 1
        %p564 = scmp.gt.s32.totalorder %s563, 0
        %s565 = scalar_select %p564, %s563, 0
        %p567 = scmp.eq.s32.totalorder %s36, 0
        // Predicated region
        $region73: #{tpu_custom_call.1} parent=51 // pred_check
          %p568 = pneg %p567
        $region74: #{tpu_custom_call.1} parent=51 // pred_check_branch
          %570 = sbr.rel (%p568) target = $region76
        $region75: #{tpu_custom_call.1} parent=51 // pred_region
          %v571 = vld [vmem:[#allocation6] sm:$0x3]
          %v572 = vld [vmem:[%s449] sm:$0xff]
          %vm573 = vcmask 261120
          %v574 = vsel %vm573, %v572, 0.0
          %575 = vadd.xlane.f32.xlu0 %v574
          %v576 = vpop.xlane.xlu0 %575
          %v577 = vrcp.pop 32.0
          %v578 = vmul.f32 %v576, %v577
          %v579 = vsub.f32 %v572, %v578
          %v580 = vmul.f32 %v579, %v579
          %v581 = vsel %vm573, %v580, 0.0
          %582 = vadd.xlane.f32.xlu0 %v581
          %v583 = vpop.xlane.xlu0 %582
          %v584 = vmul.f32 %v583, %v577
          %v585 = vadd.f32 %v584, 1e-05
          %v586 = vrsqrt.pop %v585
          %v587 = vmul.f32 %v579, %v586
          %v588 = vlaneseq
          %v589 = vshrl.u32 %v588, 7
          %v590 = vsub.s32 0, %v589
          %v591 = vrot.slane %v571, %v590
          %v592 = vmul.f32 %v587, %v591
          %v593 = vlaneseq
          %v594 = vshrl.u32 %v593, 7
          %v595 = vsub.s32 1, %v594
          %v596 = vrot.slane %v571, %v595
          %v597 = vadd.f32 %v592, %v596
          %598 = vst.msk [vmem:[#allocation2] sm:$0xff] %vm573, %v597
        $region76: #{tpu_custom_call.1} parent=51 // pred_fallthru
          _
        %v599 = vld [vmem:[#allocation2] sm:$0xff]
        %v600 = vld [vmem:[%s480] sm:$0xff]
        %v601 = vld [vmem:[%s480 + $0x8] sm:$0xff]
        %v602 = vpack.c.bf16 %v599, %v599
        %v603 = vld [vmem:[%s552] sm:$0xf]
        %v604 = vld [vmem:[%s552 + $0x4] sm:$0xf]
        %v605 = vld [vmem:[%s552 + $0x8] sm:$0xf]
        %v606 = vld [vmem:[%s552 + $0xc] sm:$0xf]
        %v607 = vld [vmem:[%s552 + $0x10] sm:$0xf]
        %v608 = vld [vmem:[%s552 + $0x14] sm:$0xf]
        %v609 = vld [vmem:[%s552 + $0x18] sm:$0xf]
        %v610 = vld [vmem:[%s552 + $0x1c] sm:$0xf]
        %v611 = vld [vmem:[%s552 + $0x20] sm:$0xf]
        %v612 = vld [vmem:[%s552 + $0x24] sm:$0xf]
        %v613 = vld [vmem:[%s552 + $0x28] sm:$0xf]
        %v614 = vld [vmem:[%s552 + $0x2c] sm:$0xf]
        %v615 = vlaneseq
        %v616 = vshrl.u32 %v615, 7
        %v617 = vsub.s32 0, %v616
        %v618 = vrot.slane %v600, %v617
        %v623 = vunpack.c.l.b16 %v603
        %v624 = vunpack.c.l.b16 %v604
        %v625 = vunpack.c.l.b16 %v605
        %v626 = vunpack.c.l.b16 %v606
        %v627 = vpack.c.b16 %v624, %v623
        %v628 = vpack.c.b16 %v626, %v625
        %vm631 = vcmask 261120
        %v633 = vsel %vm631, %v602, 0
        %635 = vmatprep.subr.bf16.mxu0 0
        %636 = vmatpush1.bf16.msra.mxu0 0
        %637 = vmatprep.subr.bf16.mxu0 0
        %638 = vmatpush1.bf16.msra.mxu0 0
        %639 = vmatprep.subr.bf16.mxu0 0
        %640 = vmatpush1.bf16.msra.mxu0 0
        %641 = vmatprep.subr.bf16.mxu0 0
        %642 = vmatpush1.bf16.msra.mxu0 0
        %643 = vmatprep.subr.bf16.mxu0 0
        %644 = vmatpush1.bf16.msra.mxu0 0
        %645 = vmatprep.subr.bf16.mxu0 0
        %646 = vmatpush1.bf16.msra.mxu0 0
        %647 = vmatprep.subr.bf16.mxu0 0
        %648 = vmatpush1.bf16.msra.mxu0 %v628
        %649 = vmatprep.subr.bf16.mxu0 0
        %650 = vmatpush1.bf16.msra.mxu0 %v627
        %651 = vmatprep.subr.bf16.mxu0 0
        %652 = vmatpush2.bf16.msra.mxu0 0
        %653 = vmatprep.subr.bf16.mxu0 0
        %654 = vmatpush2.bf16.msra.mxu0 0
        %655 = vmatprep.subr.bf16.mxu0 0
        %656 = vmatpush2.bf16.msra.mxu0 0
        %657 = vmatprep.subr.bf16.mxu0 0
        %658 = vmatpush2.bf16.msra.mxu0 0
        %659 = vmatprep.subr.bf16.mxu0 0
        %660 = vmatpush2.bf16.msra.mxu0 0
        %661 = vmatprep.subr.bf16.mxu0 0
        %662 = vmatpush2.bf16.msra.mxu0 0
        %663 = vmatprep.subr.bf16.mxu0 0
        %664 = vmatpush2.bf16.msra.mxu0 0
        %665 = vmatprep.subr.bf16.mxu0 0
        %666 = vmatpush2.bf16.msra.mxu0 0
        %667 = vmatprep.mubr.bf16.mxu0 0
        %668 = vmatmul.mubr.bf16.gmra.mxu0 %v633
        %v669 = vpop.f32.mrf.mxu0
        %v670 = vadd.f32 %v618, %v669
        %v671 = vpop.f32.mrf.mxu0
        %v672 = vpop.f32.mrf.mxu0
        %v673 = vpop.f32.mrf.mxu0
        %674 = vdwg.mxu0
        %v675 = vmul.f32 %v670, 0.35355338
        %v676 = vlaneseq
        %v677 = vshrl.u32 %v676, 7
        %v678 = vsub.s32 1, %v677
        %v679 = vrot.slane %v600, %v678
        %v684 = vunpack.c.l.b16 %v607
        %v685 = vunpack.c.l.b16 %v608
        %v686 = vunpack.c.l.b16 %v609
        %v687 = vunpack.c.l.b16 %v610
        %v688 = vpack.c.b16 %v685, %v684
        %v689 = vpack.c.b16 %v687, %v686
        %692 = vmatprep.subr.bf16.mxu0 0
        %693 = vmatpush1.bf16.msra.mxu0 0
        %694 = vmatprep.subr.bf16.mxu0 0
        %695 = vmatpush1.bf16.msra.mxu0 0
        %696 = vmatprep.subr.bf16.mxu0 0
        %697 = vmatpush1.bf16.msra.mxu0 0
        %698 = vmatprep.subr.bf16.mxu0 0
        %699 = vmatpush1.bf16.msra.mxu0 0
        %700 = vmatprep.subr.bf16.mxu0 0
        %701 = vmatpush1.bf16.msra.mxu0 0
        %702 = vmatprep.subr.bf16.mxu0 0
        %703 = vmatpush1.bf16.msra.mxu0 0
        %704 = vmatprep.subr.bf16.mxu0 0
        %705 = vmatpush1.bf16.msra.mxu0 %v689
        %706 = vmatprep.subr.bf16.mxu0 0
        %707 = vmatpush1.bf16.msra.mxu0 %v688
        %708 = vmatprep.subr.bf16.mxu0 0
        %709 = vmatpush2.bf16.msra.mxu0 0
        %710 = vmatprep.subr.bf16.mxu0 0
        %711 = vmatpush2.bf16.msra.mxu0 0
        %712 = vmatprep.subr.bf16.mxu0 0
        %713 = vmatpush2.bf16.msra.mxu0 0
        %714 = vmatprep.subr.bf16.mxu0 0
        %715 = vmatpush2.bf16.msra.mxu0 0
        %716 = vmatprep.subr.bf16.mxu0 0
        %717 = vmatpush2.bf16.msra.mxu0 0
        %718 = vmatprep.subr.bf16.mxu0 0
        %719 = vmatpush2.bf16.msra.mxu0 0
        %720 = vmatprep.subr.bf16.mxu0 0
        %721 = vmatpush2.bf16.msra.mxu0 0
        %722 = vmatprep.subr.bf16.mxu0 0
        %723 = vmatpush2.bf16.msra.mxu0 0
        %724 = vmatprep.mubr.bf16.mxu0 0
        %725 = vmatmul.mubr.bf16.gmra.mxu0 %v633
        %v726 = vpop.f32.mrf.mxu0
        %v727 = vadd.f32 %v679, %v726
        %v728 = vpop.f32.mrf.mxu0
        %v729 = vpop.f32.mrf.mxu0
        %v730 = vpop.f32.mrf.mxu0
        %731 = vdwg.mxu0
        %v732 = vlaneseq
        %v733 = vshrl.u32 %v732, 7
        %v734 = vsub.s32 2, %v733
        %v735 = vrot.slane %v600, %v734
        %v740 = vunpack.c.l.b16 %v611
        %v741 = vunpack.c.l.b16 %v612
        %v742 = vunpack.c.l.b16 %v613
        %v743 = vunpack.c.l.b16 %v614
        %v744 = vpack.c.b16 %v741, %v740
        %v745 = vpack.c.b16 %v743, %v742
        %748 = vmatprep.subr.bf16.mxu0 0
        %749 = vmatpush1.bf16.msra.mxu0 0
        %750 = vmatprep.subr.bf16.mxu0 0
        %751 = vmatpush1.bf16.msra.mxu0 0
        %752 = vmatprep.subr.bf16.mxu0 0
        %753 = vmatpush1.bf16.msra.mxu0 0
        %754 = vmatprep.subr.bf16.mxu0 0
        %755 = vmatpush1.bf16.msra.mxu0 0
        %756 = vmatprep.subr.bf16.mxu0 0
        %757 = vmatpush1.bf16.msra.mxu0 0
        %758 = vmatprep.subr.bf16.mxu0 0
        %759 = vmatpush1.bf16.msra.mxu0 0
        %760 = vmatprep.subr.bf16.mxu0 0
        %761 = vmatpush1.bf16.msra.mxu0 %v745
        %762 = vmatprep.subr.bf16.mxu0 0
        %763 = vmatpush1.bf16.msra.mxu0 %v744
        %764 = vmatprep.subr.bf16.mxu0 0
        %765 = vmatpush2.bf16.msra.mxu0 0
        %766 = vmatprep.subr.bf16.mxu0 0
        %767 = vmatpush2.bf16.msra.mxu0 0
        %768 = vmatprep.subr.bf16.mxu0 0
        %769 = vmatpush2.bf16.msra.mxu0 0
        %770 = vmatprep.subr.bf16.mxu0 0
        %771 = vmatpush2.bf16.msra.mxu0 0
        %772 = vmatprep.subr.bf16.mxu0 0
        %773 = vmatpush2.bf16.msra.mxu0 0
        %774 = vmatprep.subr.bf16.mxu0 0
        %775 = vmatpush2.bf16.msra.mxu0 0
        %776 = vmatprep.subr.bf16.mxu0 0
        %777 = vmatpush2.bf16.msra.mxu0 0
        %778 = vmatprep.subr.bf16.mxu0 0
        %779 = vmatpush2.bf16.msra.mxu0 0
        %780 = vmatprep.mubr.bf16.mxu0 0
        %781 = vmatmul.mubr.bf16.gmra.mxu0 %v633
        %v782 = vpop.f32.mrf.mxu0
        %v783 = vadd.f32 %v735, %v782
        %v784 = vpop.f32.mrf.mxu0
        %v785 = vpop.f32.mrf.mxu0
        %v786 = vpop.f32.mrf.mxu0
        %787 = vdwg.mxu0
        %v788 = vpack.c.bf16 %v675, %v675
        %790 = vrot.lane.b32.xlu0 %v788, 120
        %v791 = vpop.permute.xlu0 %790
        %792 = vrot.lane.b32.xlu0 %v788, 112
        %v793 = vpop.permute.xlu0 %792
        %794 = vrot.lane.b32.xlu0 %v788, 104
        %v795 = vpop.permute.xlu0 %794
        %v796 = vpack.c.bf16 %v727, %v727
        %798 = vrot.lane.b32.xlu0 %v796, 120
        %v799 = vpop.permute.xlu0 %798
        %800 = vrot.lane.b32.xlu0 %v796, 112
        %v801 = vpop.permute.xlu0 %800
        %802 = vrot.lane.b32.xlu0 %v796, 104
        %v803 = vpop.permute.xlu0 %802
        %v804 = vpack.c.bf16 %v783, %v783
        %806 = vrot.lane.b32.xlu0 %v804, 120
        %v807 = vpop.permute.xlu0 %806
        %808 = vrot.lane.b32.xlu0 %v804, 112
        %v809 = vpop.permute.xlu0 %808
        %810 = vrot.lane.b32.xlu0 %v804, 104
        %v811 = vpop.permute.xlu0 %810
        %vm812 = vcmask 64512
        %v814 = vsel %vm812, %v788, 0
        %v817 = vsel %vm812, %v796, 0
        %819 = vmatprep.subr.bf16.mxu0 0
        %820 = vmatpush1.bf16.xpose.msra.mxu0 0
        %821 = vmatprep.subr.bf16.mxu0 0
        %822 = vmatpush1.bf16.xpose.msra.mxu0 0
        %823 = vmatprep.subr.bf16.mxu0 0
        %824 = vmatpush1.bf16.xpose.msra.mxu0 0
        %825 = vmatprep.subr.bf16.mxu0 0
        %826 = vmatpush1.bf16.xpose.msra.mxu0 0
        %827 = vmatprep.subr.bf16.mxu0 0
        %828 = vmatpush1.bf16.xpose.msra.mxu0 0
        %829 = vmatprep.subr.bf16.mxu0 0
        %830 = vmatpush1.bf16.xpose.msra.mxu0 0
        %831 = vmatprep.subr.bf16.mxu0 0
        %832 = vmatpush1.bf16.xpose.msra.mxu0 0
        %833 = vmatprep.subr.bf16.mxu0 0
        %834 = vmatpush1.bf16.xpose.msra.mxu0 %v817
        %835 = vmatprep.subr.bf16.mxu0 0
        %836 = vmatpush2.bf16.xpose.msra.mxu0 0
        %837 = vmatprep.subr.bf16.mxu0 0
        %838 = vmatpush2.bf16.xpose.msra.mxu0 0
        %839 = vmatprep.subr.bf16.mxu0 0
        %840 = vmatpush2.bf16.xpose.msra.mxu0 0
        %841 = vmatprep.subr.bf16.mxu0 0
        %842 = vmatpush2.bf16.xpose.msra.mxu0 0
        %843 = vmatprep.subr.bf16.mxu0 0
        %844 = vmatpush2.bf16.xpose.msra.mxu0 0
        %845 = vmatprep.subr.bf16.mxu0 0
        %846 = vmatpush2.bf16.xpose.msra.mxu0 0
        %847 = vmatprep.subr.bf16.mxu0 0
        %848 = vmatpush2.bf16.xpose.msra.mxu0 0
        %849 = vmatprep.subr.bf16.mxu0 0
        %850 = vmatpush2.bf16.xpose.msra.mxu0 0
        %851 = vmatprep.mubr.bf16.mxu0 0
        %852 = vmatmul.mubr.bf16.gmra.mxu0 %v814
        %v853 = vpop.f32.mrf.mxu0
        %v854 = vadd.f32 0.0, %v853
        %v855 = vpop.f32.mrf.mxu0
        %v856 = vpop.f32.mrf.mxu0
        %v857 = vpop.f32.mrf.mxu0
        %858 = vdwg.mxu0
        %v860 = vsel %vm812, %v791, 0
        %v863 = vsel %vm812, %v799, 0
        %865 = vmatprep.subr.bf16.mxu0 0
        %866 = vmatpush1.bf16.xpose.msra.mxu0 0
        %867 = vmatprep.subr.bf16.mxu0 0
        %868 = vmatpush1.bf16.xpose.msra.mxu0 0
        %869 = vmatprep.subr.bf16.mxu0 0
        %870 = vmatpush1.bf16.xpose.msra.mxu0 0
        %871 = vmatprep.subr.bf16.mxu0 0
        %872 = vmatpush1.bf16.xpose.msra.mxu0 0
        %873 = vmatprep.subr.bf16.mxu0 0
        %874 = vmatpush1.bf16.xpose.msra.mxu0 0
        %875 = vmatprep.subr.bf16.mxu0 0
        %876 = vmatpush1.bf16.xpose.msra.mxu0 0
        %877 = vmatprep.subr.bf16.mxu0 0
        %878 = vmatpush1.bf16.xpose.msra.mxu0 0
        %879 = vmatprep.subr.bf16.mxu0 0
        %880 = vmatpush1.bf16.xpose.msra.mxu0 %v863
        %881 = vmatprep.subr.bf16.mxu0 0
        %882 = vmatpush2.bf16.xpose.msra.mxu0 0
        %883 = vmatprep.subr.bf16.mxu0 0
        %884 = vmatpush2.bf16.xpose.msra.mxu0 0
        %885 = vmatprep.subr.bf16.mxu0 0
        %886 = vmatpush2.bf16.xpose.msra.mxu0 0
        %887 = vmatprep.subr.bf16.mxu0 0
        %888 = vmatpush2.bf16.xpose.msra.mxu0 0
        %889 = vmatprep.subr.bf16.mxu0 0
        %890 = vmatpush2.bf16.xpose.msra.mxu0 0
        %891 = vmatprep.subr.bf16.mxu0 0
        %892 = vmatpush2.bf16.xpose.msra.mxu0 0
        %893 = vmatprep.subr.bf16.mxu0 0
        %894 = vmatpush2.bf16.xpose.msra.mxu0 0
        %895 = vmatprep.subr.bf16.mxu0 0
        %896 = vmatpush2.bf16.xpose.msra.mxu0 0
        %897 = vmatprep.mubr.bf16.mxu0 0
        %898 = vmatmul.mubr.bf16.gmra.mxu0 %v860
        %v899 = vpop.f32.mrf.mxu0
        %v900 = vadd.f32 0.0, %v899
        %v901 = vpop.f32.mrf.mxu0
        %v902 = vpop.f32.mrf.mxu0
        %v903 = vpop.f32.mrf.mxu0
        %904 = vdwg.mxu0
        %v906 = vsel %vm812, %v793, 0
        %v909 = vsel %vm812, %v801, 0
        %911 = vmatprep.subr.bf16.mxu0 0
        %912 = vmatpush1.bf16.xpose.msra.mxu0 0
        %913 = vmatprep.subr.bf16.mxu0 0
        %914 = vmatpush1.bf16.xpose.msra.mxu0 0
        %915 = vmatprep.subr.bf16.mxu0 0
        %916 = vmatpush1.bf16.xpose.msra.mxu0 0
        %917 = vmatprep.subr.bf16.mxu0 0
        %918 = vmatpush1.bf16.xpose.msra.mxu0 0
        %919 = vmatprep.subr.bf16.mxu0 0
        %920 = vmatpush1.bf16.xpose.msra.mxu0 0
        %921 = vmatprep.subr.bf16.mxu0 0
        %922 = vmatpush1.bf16.xpose.msra.mxu0 0
        %923 = vmatprep.subr.bf16.mxu0 0
        %924 = vmatpush1.bf16.xpose.msra.mxu0 0
        %925 = vmatprep.subr.bf16.mxu0 0
        %926 = vmatpush1.bf16.xpose.msra.mxu0 %v909
        %927 = vmatprep.subr.bf16.mxu0 0
        %928 = vmatpush2.bf16.xpose.msra.mxu0 0
        %929 = vmatprep.subr.bf16.mxu0 0
        %930 = vmatpush2.bf16.xpose.msra.mxu0 0
        %931 = vmatprep.subr.bf16.mxu0 0
        %932 = vmatpush2.bf16.xpose.msra.mxu0 0
        %933 = vmatprep.subr.bf16.mxu0 0
        %934 = vmatpush2.bf16.xpose.msra.mxu0 0
        %935 = vmatprep.subr.bf16.mxu0 0
        %936 = vmatpush2.bf16.xpose.msra.mxu0 0
        %937 = vmatprep.subr.bf16.mxu0 0
        %938 = vmatpush2.bf16.xpose.msra.mxu0 0
        %939 = vmatprep.subr.bf16.mxu0 0
        %940 = vmatpush2.bf16.xpose.msra.mxu0 0
        %941 = vmatprep.subr.bf16.mxu0 0
        %942 = vmatpush2.bf16.xpose.msra.mxu0 0
        %943 = vmatprep.mubr.bf16.mxu0 0
        %944 = vmatmul.mubr.bf16.gmra.mxu0 %v906
        %v945 = vpop.f32.mrf.mxu0
        %v946 = vadd.f32 0.0, %v945
        %v947 = vpop.f32.mrf.mxu0
        %v948 = vpop.f32.mrf.mxu0
        %v949 = vpop.f32.mrf.mxu0
        %950 = vdwg.mxu0
        %v952 = vsel %vm812, %v795, 0
        %v955 = vsel %vm812, %v803, 0
        %957 = vmatprep.subr.bf16.mxu0 0
        %958 = vmatpush1.bf16.xpose.msra.mxu0 0
        %959 = vmatprep.subr.bf16.mxu0 0
        %960 = vmatpush1.bf16.xpose.msra.mxu0 0
        %961 = vmatprep.subr.bf16.mxu0 0
        %962 = vmatpush1.bf16.xpose.msra.mxu0 0
        %963 = vmatprep.subr.bf16.mxu0 0
        %964 = vmatpush1.bf16.xpose.msra.mxu0 0
        %965 = vmatprep.subr.bf16.mxu0 0
        %966 = vmatpush1.bf16.xpose.msra.mxu0 0
        %967 = vmatprep.subr.bf16.mxu0 0
        %968 = vmatpush1.bf16.xpose.msra.mxu0 0
        %969 = vmatprep.subr.bf16.mxu0 0
        %970 = vmatpush1.bf16.xpose.msra.mxu0 0
        %971 = vmatprep.subr.bf16.mxu0 0
        %972 = vmatpush1.bf16.xpose.msra.mxu0 %v955
        %973 = vmatprep.subr.bf16.mxu0 0
        %974 = vmatpush2.bf16.xpose.msra.mxu0 0
        %975 = vmatprep.subr.bf16.mxu0 0
        %976 = vmatpush2.bf16.xpose.msra.mxu0 0
        %977 = vmatprep.subr.bf16.mxu0 0
        %978 = vmatpush2.bf16.xpose.msra.mxu0 0
        %979 = vmatprep.subr.bf16.mxu0 0
        %980 = vmatpush2.bf16.xpose.msra.mxu0 0
        %981 = vmatprep.subr.bf16.mxu0 0
        %982 = vmatpush2.bf16.xpose.msra.mxu0 0
        %983 = vmatprep.subr.bf16.mxu0 0
        %984 = vmatpush2.bf16.xpose.msra.mxu0 0
        %985 = vmatprep.subr.bf16.mxu0 0
        %986 = vmatpush2.bf16.xpose.msra.mxu0 0
        %987 = vmatprep.subr.bf16.mxu0 0
        %988 = vmatpush2.bf16.xpose.msra.mxu0 0
        %989 = vmatprep.mubr.bf16.mxu0 0
        %990 = vmatmul.mubr.bf16.gmra.mxu0 %v952
        %v991 = vpop.f32.mrf.mxu0
        %v992 = vadd.f32 0.0, %v991
        %v993 = vpop.f32.mrf.mxu0
        %v994 = vpop.f32.mrf.mxu0
        %v995 = vpop.f32.mrf.mxu0
        %996 = vdwg.mxu0
        %v997 = vsel %vm812, %v854, -inf
        %998 = vmax.xlane.f32.xlu0 %v997
        %v999 = vpop.xlane.xlu0 %998
        %v1000 = vsel %vm812, %v900, -inf
        %1001 = vmax.xlane.f32.xlu0 %v1000
        %v1002 = vpop.xlane.xlu0 %1001
        %v1003 = vsel %vm812, %v946, -inf
        %1004 = vmax.xlane.f32.xlu0 %v1003
        %v1005 = vpop.xlane.xlu0 %1004
        %v1006 = vsel %vm812, %v992, -inf
        %1007 = vmax.xlane.f32.xlu0 %v1006
        %v1008 = vpop.xlane.xlu0 %1007
        %v1009 = vsub.f32 %v854, %v999
        %v1010 = vsub.f32 %v900, %v1002
        %v1011 = vsub.f32 %v946, %v1005
        %v1012 = vsub.f32 %v992, %v1008
        %v1013 = vmul.f32 %v1009, 1.442695
        %v1014 = vpow.pop %v1013
        %v1015 = vmul.f32 %v1010, 1.442695
        %v1016 = vpow.pop %v1015
        %v1017 = vmul.f32 %v1011, 1.442695
        %v1018 = vpow.pop %v1017
        %v1019 = vmul.f32 %v1012, 1.442695
        %v1020 = vpow.pop %v1019
        %v1021 = vsel %vm812, %v1014, 0.0
        %1022 = vadd.xlane.f32.xlu0 %v1021
        %v1023 = vpop.xlane.xlu0 %1022
        %v1024 = vsel %vm812, %v1016, 0.0
        %1025 = vadd.xlane.f32.xlu0 %v1024
        %v1026 = vpop.xlane.xlu0 %1025
        %v1027 = vsel %vm812, %v1018, 0.0
        %1028 = vadd.xlane.f32.xlu0 %v1027
        %v1029 = vpop.xlane.xlu0 %1028
        %v1030 = vsel %vm812, %v1020, 0.0
        %1031 = vadd.xlane.f32.xlu0 %v1030
        %v1032 = vpop.xlane.xlu0 %1031
        %v1033 = vrcp.pop %v1023
        %v1034 = vrcp.pop %v1026
        %v1035 = vrcp.pop %v1029
        %v1036 = vrcp.pop %v1032
        %v1037 = vmul.f32 %v1014, %v1033
        %v1038 = vmul.f32 %v1016, %v1034
        %v1039 = vmul.f32 %v1018, %v1035
        %v1040 = vmul.f32 %v1020, %v1036
        %v1041 = vpack.c.bf16 %v1037, %v1037
        %v1042 = vpack.c.bf16 %v1038, %v1038
        %v1043 = vpack.c.bf16 %v1039, %v1039
        %v1044 = vpack.c.bf16 %v1040, %v1040
        %v1046 = vsel %vm812, %v1041, 0
        %vm1048 = vcmask 1043456
        %v1050 = vsel %vm1048, %v804, 0
        %1052 = vmatprep.subr.bf16.mxu0 0
        %1053 = vmatpush1.bf16.msra.mxu0 0
        %1054 = vmatprep.subr.bf16.mxu0 0
        %1055 = vmatpush1.bf16.msra.mxu0 0
        %1056 = vmatprep.subr.bf16.mxu0 0
        %1057 = vmatpush1.bf16.msra.mxu0 0
        %1058 = vmatprep.subr.bf16.mxu0 0
        %1059 = vmatpush1.bf16.msra.mxu0 0
        %1060 = vmatprep.subr.bf16.mxu0 0
        %1061 = vmatpush1.bf16.msra.mxu0 0
        %1062 = vmatprep.subr.bf16.mxu0 0
        %1063 = vmatpush1.bf16.msra.mxu0 0
        %1064 = vmatprep.subr.bf16.mxu0 0
        %1065 = vmatpush1.bf16.msra.mxu0 0
        %1066 = vmatprep.subr.bf16.mxu0 0
        %1067 = vmatpush1.bf16.msra.mxu0 %v1050
        %1068 = vmatprep.subr.bf16.mxu0 0
        %1069 = vmatpush2.bf16.msra.mxu0 0
        %1070 = vmatprep.subr.bf16.mxu0 0
        %1071 = vmatpush2.bf16.msra.mxu0 0
        %1072 = vmatprep.subr.bf16.mxu0 0
        %1073 = vmatpush2.bf16.msra.mxu0 0
        %1074 = vmatprep.subr.bf16.mxu0 0
        %1075 = vmatpush2.bf16.msra.mxu0 0
        %1076 = vmatprep.subr.bf16.mxu0 0
        %1077 = vmatpush2.bf16.msra.mxu0 0
        %1078 = vmatprep.subr.bf16.mxu0 0
        %1079 = vmatpush2.bf16.msra.mxu0 0
        %1080 = vmatprep.subr.bf16.mxu0 0
        %1081 = vmatpush2.bf16.msra.mxu0 0
        %1082 = vmatprep.subr.bf16.mxu0 0
        %1083 = vmatpush2.bf16.msra.mxu0 0
        %1084 = vmatprep.mubr.bf16.mxu0 0
        %1085 = vmatmul.mubr.bf16.gmra.mxu0 %v1046
        %v1086 = vpop.f32.mrf.mxu0
        %v1087 = vadd.f32 0.0, %v1086
        %v1088 = vpop.f32.mrf.mxu0
        %v1089 = vpop.f32.mrf.mxu0
        %v1090 = vpop.f32.mrf.mxu0
        %1091 = vdwg.mxu0
        %v1093 = vsel %vm812, %v1042, 0
        %v1096 = vsel %vm1048, %v807, 0
        %1098 = vmatprep.subr.bf16.mxu0 0
        %1099 = vmatpush1.bf16.msra.mxu0 0
        %1100 = vmatprep.subr.bf16.mxu0 0
        %1101 = vmatpush1.bf16.msra.mxu0 0
        %1102 = vmatprep.subr.bf16.mxu0 0
        %1103 = vmatpush1.bf16.msra.mxu0 0
        %1104 = vmatprep.subr.bf16.mxu0 0
        %1105 = vmatpush1.bf16.msra.mxu0 0
        %1106 = vmatprep.subr.bf16.mxu0 0
        %1107 = vmatpush1.bf16.msra.mxu0 0
        %1108 = vmatprep.subr.bf16.mxu0 0
        %1109 = vmatpush1.bf16.msra.mxu0 0
        %1110 = vmatprep.subr.bf16.mxu0 0
        %1111 = vmatpush1.bf16.msra.mxu0 0
        %1112 = vmatprep.subr.bf16.mxu0 0
        %1113 = vmatpush1.bf16.msra.mxu0 %v1096
        %1114 = vmatprep.subr.bf16.mxu0 0
        %1115 = vmatpush2.bf16.msra.mxu0 0
        %1116 = vmatprep.subr.bf16.mxu0 0
        %1117 = vmatpush2.bf16.msra.mxu0 0
        %1118 = vmatprep.subr.bf16.mxu0 0
        %1119 = vmatpush2.bf16.msra.mxu0 0
        %1120 = vmatprep.subr.bf16.mxu0 0
        %1121 = vmatpush2.bf16.msra.mxu0 0
        %1122 = vmatprep.subr.bf16.mxu0 0
        %1123 = vmatpush2.bf16.msra.mxu0 0
        %1124 = vmatprep.subr.bf16.mxu0 0
        %1125 = vmatpush2.bf16.msra.mxu0 0
        %1126 = vmatprep.subr.bf16.mxu0 0
        %1127 = vmatpush2.bf16.msra.mxu0 0
        %1128 = vmatprep.subr.bf16.mxu0 0
        %1129 = vmatpush2.bf16.msra.mxu0 0
        %1130 = vmatprep.mubr.bf16.mxu0 0
        %1131 = vmatmul.mubr.bf16.gmra.mxu0 %v1093
        %v1132 = vpop.f32.mrf.mxu0
        %v1133 = vadd.f32 0.0, %v1132
        %v1134 = vpop.f32.mrf.mxu0
        %v1135 = vpop.f32.mrf.mxu0
        %v1136 = vpop.f32.mrf.mxu0
        %1137 = vdwg.mxu0
        %v1139 = vsel %vm812, %v1043, 0
        %v1142 = vsel %vm1048, %v809, 0
        %1144 = vmatprep.subr.bf16.mxu0 0
        %1145 = vmatpush1.bf16.msra.mxu0 0
        %1146 = vmatprep.subr.bf16.mxu0 0
        %1147 = vmatpush1.bf16.msra.mxu0 0
        %1148 = vmatprep.subr.bf16.mxu0 0
        %1149 = vmatpush1.bf16.msra.mxu0 0
        %1150 = vmatprep.subr.bf16.mxu0 0
        %1151 = vmatpush1.bf16.msra.mxu0 0
        %1152 = vmatprep.subr.bf16.mxu0 0
        %1153 = vmatpush1.bf16.msra.mxu0 0
        %1154 = vmatprep.subr.bf16.mxu0 0
        %1155 = vmatpush1.bf16.msra.mxu0 0
        %1156 = vmatprep.subr.bf16.mxu0 0
        %1157 = vmatpush1.bf16.msra.mxu0 0
        %1158 = vmatprep.subr.bf16.mxu0 0
        %1159 = vmatpush1.bf16.msra.mxu0 %v1142
        %1160 = vmatprep.subr.bf16.mxu0 0
        %1161 = vmatpush2.bf16.msra.mxu0 0
        %1162 = vmatprep.subr.bf16.mxu0 0
        %1163 = vmatpush2.bf16.msra.mxu0 0
        %1164 = vmatprep.subr.bf16.mxu0 0
        %1165 = vmatpush2.bf16.msra.mxu0 0
        %1166 = vmatprep.subr.bf16.mxu0 0
        %1167 = vmatpush2.bf16.msra.mxu0 0
        %1168 = vmatprep.subr.bf16.mxu0 0
        %1169 = vmatpush2.bf16.msra.mxu0 0
        %1170 = vmatprep.subr.bf16.mxu0 0
        %1171 = vmatpush2.bf16.msra.mxu0 0
        %1172 = vmatprep.subr.bf16.mxu0 0
        %1173 = vmatpush2.bf16.msra.mxu0 0
        %1174 = vmatprep.subr.bf16.mxu0 0
        %1175 = vmatpush2.bf16.msra.mxu0 0
        %1176 = vmatprep.mubr.bf16.mxu0 0
        %1177 = vmatmul.mubr.bf16.gmra.mxu0 %v1139
        %v1178 = vpop.f32.mrf.mxu0
        %v1179 = vadd.f32 0.0, %v1178
        %v1180 = vpop.f32.mrf.mxu0
        %v1181 = vpop.f32.mrf.mxu0
        %v1182 = vpop.f32.mrf.mxu0
        %1183 = vdwg.mxu0
        %v1185 = vsel %vm812, %v1044, 0
        %v1188 = vsel %vm1048, %v811, 0
        %1190 = vmatprep.subr.bf16.mxu0 0
        %1191 = vmatpush1.bf16.msra.mxu0 0
        %1192 = vmatprep.subr.bf16.mxu0 0
        %1193 = vmatpush1.bf16.msra.mxu0 0
        %1194 = vmatprep.subr.bf16.mxu0 0
        %1195 = vmatpush1.bf16.msra.mxu0 0
        %1196 = vmatprep.subr.bf16.mxu0 0
        %1197 = vmatpush1.bf16.msra.mxu0 0
        %1198 = vmatprep.subr.bf16.mxu0 0
        %1199 = vmatpush1.bf16.msra.mxu0 0
        %1200 = vmatprep.subr.bf16.mxu0 0
        %1201 = vmatpush1.bf16.msra.mxu0 0
        %1202 = vmatprep.subr.bf16.mxu0 0
        %1203 = vmatpush1.bf16.msra.mxu0 0
        %1204 = vmatprep.subr.bf16.mxu0 0
        %1205 = vmatpush1.bf16.msra.mxu0 %v1188
        %1206 = vmatprep.subr.bf16.mxu0 0
        %1207 = vmatpush2.bf16.msra.mxu0 0
        %1208 = vmatprep.subr.bf16.mxu0 0
        %1209 = vmatpush2.bf16.msra.mxu0 0
        %1210 = vmatprep.subr.bf16.mxu0 0
        %1211 = vmatpush2.bf16.msra.mxu0 0
        %1212 = vmatprep.subr.bf16.mxu0 0
        %1213 = vmatpush2.bf16.msra.mxu0 0
        %1214 = vmatprep.subr.bf16.mxu0 0
        %1215 = vmatpush2.bf16.msra.mxu0 0
        %1216 = vmatprep.subr.bf16.mxu0 0
        %1217 = vmatpush2.bf16.msra.mxu0 0
        %1218 = vmatprep.subr.bf16.mxu0 0
        %1219 = vmatpush2.bf16.msra.mxu0 0
        %1220 = vmatprep.subr.bf16.mxu0 0
        %1221 = vmatpush2.bf16.msra.mxu0 0
        %1222 = vmatprep.mubr.bf16.mxu0 0
        %1223 = vmatmul.mubr.bf16.gmra.mxu0 %v1185
        %v1224 = vpop.f32.mrf.mxu0
        %v1225 = vadd.f32 0.0, %v1224
        %v1226 = vpop.f32.mrf.mxu0
        %v1227 = vpop.f32.mrf.mxu0
        %v1228 = vpop.f32.mrf.mxu0
        %1229 = vdwg.mxu0
        %1231 = vrot.lane.b32.xlu0 %v1133, 8
        %v1232 = vpop.permute.xlu0 %1231
        %1235 = vrot.lane.b32.xlu0 %v1179, 16
        %v1236 = vpop.permute.xlu0 %1235
        %1239 = vrot.lane.b32.xlu0 %v1225, 24
        %v1240 = vpop.permute.xlu0 %1239
        %v1242 = vsel %vm812, %v1087, %v1232
        %vm1243 = vcmask 130048
        %v1244 = vsel %vm1243, %v1242, %v1236
        %vm1245 = vcmask 195584
        %v1246 = vsel %vm1245, %v1244, %v1240
        %v1247 = vpack.c.bf16 %v1246, %v1246
        %v1248 = vld [vmem:[%s462] sm:$0xf]
        %v1249 = vld [vmem:[%s462 + $0x4] sm:$0xf]
        %v1250 = vld [vmem:[%s462 + $0x8] sm:$0xf]
        %v1251 = vld [vmem:[%s462 + $0xc] sm:$0xf]
        %v1252 = vlaneseq
        %v1253 = vshrl.u32 %v1252, 7
        %v1254 = vsub.s32 3, %v1253
        %v1255 = vrot.slane %v600, %v1254
        %v1260 = vunpack.c.l.b16 %v1248
        %v1261 = vunpack.c.l.b16 %v1249
        %v1262 = vunpack.c.l.b16 %v1250
        %v1263 = vunpack.c.l.b16 %v1251
        %v1264 = vpack.c.b16 %v1261, %v1260
        %v1265 = vpack.c.b16 %v1263, %v1262
        %v1269 = vsel %vm631, %v1247, 0
        %1271 = vmatprep.subr.bf16.mxu0 0
        %1272 = vmatpush1.bf16.msra.mxu0 0
        %1273 = vmatprep.subr.bf16.mxu0 0
        %1274 = vmatpush1.bf16.msra.mxu0 0
        %1275 = vmatprep.subr.bf16.mxu0 0
        %1276 = vmatpush1.bf16.msra.mxu0 0
        %1277 = vmatprep.subr.bf16.mxu0 0
        %1278 = vmatpush1.bf16.msra.mxu0 0
        %1279 = vmatprep.subr.bf16.mxu0 0
        %1280 = vmatpush1.bf16.msra.mxu0 0
        %1281 = vmatprep.subr.bf16.mxu0 0
        %1282 = vmatpush1.bf16.msra.mxu0 0
        %1283 = vmatprep.subr.bf16.mxu0 0
        %1284 = vmatpush1.bf16.msra.mxu0 %v1265
        %1285 = vmatprep.subr.bf16.mxu0 0
        %1286 = vmatpush1.bf16.msra.mxu0 %v1264
        %1287 = vmatprep.subr.bf16.mxu0 0
        %1288 = vmatpush2.bf16.msra.mxu0 0
        %1289 = vmatprep.subr.bf16.mxu0 0
        %1290 = vmatpush2.bf16.msra.mxu0 0
        %1291 = vmatprep.subr.bf16.mxu0 0
        %1292 = vmatpush2.bf16.msra.mxu0 0
        %1293 = vmatprep.subr.bf16.mxu0 0
        %1294 = vmatpush2.bf16.msra.mxu0 0
        %1295 = vmatprep.subr.bf16.mxu0 0
        %1296 = vmatpush2.bf16.msra.mxu0 0
        %1297 = vmatprep.subr.bf16.mxu0 0
        %1298 = vmatpush2.bf16.msra.mxu0 0
        %1299 = vmatprep.subr.bf16.mxu0 0
        %1300 = vmatpush2.bf16.msra.mxu0 0
        %1301 = vmatprep.subr.bf16.mxu0 0
        %1302 = vmatpush2.bf16.msra.mxu0 0
        %1303 = vmatprep.mubr.bf16.mxu0 0
        %1304 = vmatmul.mubr.bf16.gmra.mxu0 %v1269
        %v1305 = vpop.f32.mrf.mxu0
        %v1306 = vadd.f32 %v1255, %v1305
        %v1307 = vpop.f32.mrf.mxu0
        %v1308 = vpop.f32.mrf.mxu0
        %v1309 = vpop.f32.mrf.mxu0
        %1310 = vdwg.mxu0
        %p1311 = scmp.eq.s32.totalorder %s36, 2
        // Predicated region
        $region77: #{tpu_custom_call.1} parent=51 // pred_check
          %p1312 = pneg %p1311
        $region78: #{tpu_custom_call.1} parent=51 // pred_check_branch
          %1314 = sbr.rel (%p1312) target = $region80
        $region79: #{tpu_custom_call.1} parent=51 // pred_region
          %v1315 = vsel %vm812, %v1037, 0.0
          %v1316 = vsel %vm812, %v1038, 0.0
          %v1317 = vadd.f32 %v1315, %v1316
          %v1318 = vsel %vm812, %v1039, 0.0
          %v1319 = vadd.f32 %v1317, %v1318
          %v1320 = vsel %vm812, %v1040, 0.0
          %v1321 = vadd.f32 %v1319, %v1320
          %v1322 = vmul.f32 %v1321, 0.25
          %1323 = vst.msk [vmem:[%s547] sm:$0xff] %vm812, %v1322
        $region80: #{tpu_custom_call.1} parent=51 // pred_fallthru
          _
        %v1324 = vadd.f32 %v599, %v1306
        %v1325 = vsel %vm631, %v1324, 0.0
        %1326 = vadd.xlane.f32.xlu0 %v1325
        %v1327 = vpop.xlane.xlu0 %1326
        %v1328 = vrcp.pop 32.0
        %v1329 = vmul.f32 %v1327, %v1328
        %v1330 = vsub.f32 %v1324, %v1329
        %v1331 = vmul.f32 %v1330, %v1330
        %v1332 = vsel %vm631, %v1331, 0.0
        %1333 = vadd.xlane.f32.xlu0 %v1332
        %v1334 = vpop.xlane.xlu0 %1333
        %v1335 = vmul.f32 %v1334, %v1328
        %v1336 = vadd.f32 %v1335, 1e-05
        %v1337 = vrsqrt.pop %v1336
        %v1338 = vmul.f32 %v1330, %v1337
        %v1339 = vlaneseq
        %v1340 = vshrl.u32 %v1339, 7
        %v1341 = vsub.s32 4, %v1340
        %v1342 = vrot.slane %v600, %v1341
        %v1343 = vmul.f32 %v1338, %v1342
        %v1344 = vlaneseq
        %v1345 = vshrl.u32 %v1344, 7
        %v1346 = vsub.s32 5, %v1345
        %v1347 = vrot.slane %v600, %v1346
        %v1348 = vadd.f32 %v1343, %v1347
        %v1349 = vpack.c.bf16 %v1348, %v1348
        %v1350 = vld [vmem:[%s471] sm:$0xf]
        %v1351 = vld [vmem:[%s471 + $0x4] sm:$0xf]
        %v1352 = vld [vmem:[%s471 + $0x8] sm:$0xf]
        %v1353 = vld [vmem:[%s471 + $0xc] sm:$0xf]
        %v1354 = vld [vmem:[%s560] sm:$0x1]
        %v1356 = vlaneseq
        %v1357 = vshrl.u32 %v1356, 7
        %v1358 = vsub.s32 0, %v1357
        %v1359 = vrot.slane %v1354, %v1358
        %v1365 = vunpack.c.l.b16 %v1350
        %v1366 = vunpack.c.l.b16 %v1351
        %v1367 = vunpack.c.l.b16 %v1352
        %v1368 = vunpack.c.l.b16 %v1353
        %v1369 = vpack.c.b16 %v1366, %v1365
        %v1370 = vpack.c.b16 %v1368, %v1367
        %v1374 = vsel %vm631, %v1349, 0
        %1376 = vmatprep.subr.bf16.mxu0 0
        %1377 = vmatpush1.bf16.msra.mxu0 0
        %1378 = vmatprep.subr.bf16.mxu0 0
        %1379 = vmatpush1.bf16.msra.mxu0 0
        %1380 = vmatprep.subr.bf16.mxu0 0
        %1381 = vmatpush1.bf16.msra.mxu0 0
        %1382 = vmatprep.subr.bf16.mxu0 0
        %1383 = vmatpush1.bf16.msra.mxu0 0
        %1384 = vmatprep.subr.bf16.mxu0 0
        %1385 = vmatpush1.bf16.msra.mxu0 0
        %1386 = vmatprep.subr.bf16.mxu0 0
        %1387 = vmatpush1.bf16.msra.mxu0 0
        %1388 = vmatprep.subr.bf16.mxu0 0
        %1389 = vmatpush1.bf16.msra.mxu0 %v1370
        %1390 = vmatprep.subr.bf16.mxu0 0
        %1391 = vmatpush1.bf16.msra.mxu0 %v1369
        %1392 = vmatprep.subr.bf16.mxu0 0
        %1393 = vmatpush2.bf16.msra.mxu0 0
        %1394 = vmatprep.subr.bf16.mxu0 0
        %1395 = vmatpush2.bf16.msra.mxu0 0
        %1396 = vmatprep.subr.bf16.mxu0 0
        %1397 = vmatpush2.bf16.msra.mxu0 0
        %1398 = vmatprep.subr.bf16.mxu0 0
        %1399 = vmatpush2.bf16.msra.mxu0 0
        %1400 = vmatprep.subr.bf16.mxu0 0
        %1401 = vmatpush2.bf16.msra.mxu0 0
        %1402 = vmatprep.subr.bf16.mxu0 0
        %1403 = vmatpush2.bf16.msra.mxu0 0
        %1404 = vmatprep.subr.bf16.mxu0 0
        %1405 = vmatpush2.bf16.msra.mxu0 0
        %1406 = vmatprep.subr.bf16.mxu0 0
        %1407 = vmatpush2.bf16.msra.mxu0 0
        %1408 = vmatprep.mubr.bf16.mxu0 0
        %1409 = vmatmul.mubr.bf16.gmra.mxu0 %v1374
        %v1410 = vpop.f32.mrf.mxu0
        %v1411 = vadd.f32 %v1359, %v1410
        %v1412 = vpop.f32.mrf.mxu0
        %v1413 = vpop.f32.mrf.mxu0
        %v1414 = vpop.f32.mrf.mxu0
        %1415 = vdwg.mxu0
        %v1416 = vmax.f32 %v1411, 0.0
        %v1417 = vpack.c.bf16 %v1416, %v1416
        %v1418 = vld [vmem:[%s557] sm:$0xf]
        %v1419 = vld [vmem:[%s557 + $0x4] sm:$0xf]
        %v1420 = vld [vmem:[%s557 + $0x8] sm:$0xf]
        %v1421 = vld [vmem:[%s557 + $0xc] sm:$0xf]
        %v1422 = vld [vmem:[%s557 + $0x10] sm:$0xf]
        %v1423 = vld [vmem:[%s557 + $0x14] sm:$0xf]
        %v1424 = vld [vmem:[%s557 + $0x18] sm:$0xf]
        %v1425 = vld [vmem:[%s557 + $0x1c] sm:$0xf]
        %v1426 = vlaneseq
        %v1427 = vshrl.u32 %v1426, 7
        %v1428 = vsub.s32 6, %v1427
        %v1429 = vrot.slane %v600, %v1428
        %v1438 = vunpack.c.l.b16 %v1418
        %v1439 = vunpack.c.l.b16 %v1419
        %v1440 = vunpack.c.l.b16 %v1420
        %v1441 = vunpack.c.l.b16 %v1421
        %v1442 = vunpack.c.l.b16 %v1422
        %v1443 = vunpack.c.l.b16 %v1423
        %v1444 = vunpack.c.l.b16 %v1424
        %v1445 = vunpack.c.l.b16 %v1425
        %v1446 = vpack.c.b16 %v1439, %v1438
        %v1447 = vpack.c.b16 %v1441, %v1440
        %v1448 = vpack.c.b16 %v1443, %v1442
        %v1449 = vpack.c.b16 %v1445, %v1444
        %vm1454 = vcmask 523264
        %v1456 = vsel %vm1454, %v1417, 0
        %1458 = vmatprep.subr.bf16.mxu0 0
        %1459 = vmatpush1.bf16.msra.mxu0 0
        %1460 = vmatprep.subr.bf16.mxu0 0
        %1461 = vmatpush1.bf16.msra.mxu0 0
        %1462 = vmatprep.subr.bf16.mxu0 0
        %1463 = vmatpush1.bf16.msra.mxu0 0
        %1464 = vmatprep.subr.bf16.mxu0 0
        %1465 = vmatpush1.bf16.msra.mxu0 0
        %1466 = vmatprep.subr.bf16.mxu0 0
        %1467 = vmatpush1.bf16.msra.mxu0 %v1449
        %1468 = vmatprep.subr.bf16.mxu0 0
        %1469 = vmatpush1.bf16.msra.mxu0 %v1448
        %1470 = vmatprep.subr.bf16.mxu0 0
        %1471 = vmatpush1.bf16.msra.mxu0 %v1447
        %1472 = vmatprep.subr.bf16.mxu0 0
        %1473 = vmatpush1.bf16.msra.mxu0 %v1446
        %1474 = vmatprep.subr.bf16.mxu0 0
        %1475 = vmatpush2.bf16.msra.mxu0 0
        %1476 = vmatprep.subr.bf16.mxu0 0
        %1477 = vmatpush2.bf16.msra.mxu0 0
        %1478 = vmatprep.subr.bf16.mxu0 0
        %1479 = vmatpush2.bf16.msra.mxu0 0
        %1480 = vmatprep.subr.bf16.mxu0 0
        %1481 = vmatpush2.bf16.msra.mxu0 0
        %1482 = vmatprep.subr.bf16.mxu0 0
        %1483 = vmatpush2.bf16.msra.mxu0 0
        %1484 = vmatprep.subr.bf16.mxu0 0
        %1485 = vmatpush2.bf16.msra.mxu0 0
        %1486 = vmatprep.subr.bf16.mxu0 0
        %1487 = vmatpush2.bf16.msra.mxu0 0
        %1488 = vmatprep.subr.bf16.mxu0 0
        %1489 = vmatpush2.bf16.msra.mxu0 0
        %1490 = vmatprep.mubr.bf16.mxu0 0
        %1491 = vmatmul.mubr.bf16.gmra.mxu0 %v1456
        %v1492 = vpop.f32.mrf.mxu0
        %v1493 = vadd.f32 %v1429, %v1492
        %v1494 = vpop.f32.mrf.mxu0
        %v1495 = vpop.f32.mrf.mxu0
        %v1496 = vpop.f32.mrf.mxu0
        %1497 = vdwg.mxu0
        %v1498 = vadd.f32 %v1348, %v1493
        %v1499 = vsel %vm631, %v1498, 0.0
        %1500 = vadd.xlane.f32.xlu0 %v1499
        %v1501 = vpop.xlane.xlu0 %1500
        %v1502 = vmul.f32 %v1501, %v1328
        %v1503 = vsub.f32 %v1498, %v1502
        %v1504 = vmul.f32 %v1503, %v1503
        %v1505 = vsel %vm631, %v1504, 0.0
        %1506 = vadd.xlane.f32.xlu0 %v1505
        %v1507 = vpop.xlane.xlu0 %1506
        %v1508 = vmul.f32 %v1507, %v1328
        %v1509 = vadd.f32 %v1508, 1e-05
        %v1510 = vrsqrt.pop %v1509
        %v1511 = vmul.f32 %v1503, %v1510
        %v1512 = vlaneseq
        %v1513 = vshrl.u32 %v1512, 7
        %v1514 = vsub.s32 7, %v1513
        %v1515 = vrot.slane %v600, %v1514
        %v1516 = vmul.f32 %v1511, %v1515
        %v1517 = vlaneseq
        %v1518 = vshrl.u32 %v1517, 7
        %v1519 = vsub.s32 0, %v1518
        %v1520 = vrot.slane %v601, %v1519
        %v1521 = vadd.f32 %v1516, %v1520
        %1522 = vst.msk [vmem:[#allocation2] sm:$0xff] %vm631, %v1521
        %p1523 = scmp.eq.s32.totalorder %s36, 1
        // Predicated region
        $region81: #{tpu_custom_call.1} parent=51 // pred_check
          %p1524 = pneg %p1523
        $region82: #{tpu_custom_call.1} parent=51 // pred_check_branch
          %1526 = sbr.rel (%p1524) target = $region84
        $region83: #{tpu_custom_call.1} parent=51 // pred_region
          %1527 = vst.msk [vmem:[%s540] sm:$0xff] %vm631, %v1521
        $region84: #{tpu_custom_call.1} parent=51 // pred_fallthru
          _
        %s1528 = sand.u32 %s266, 1
        %s1529 = scalar_lea.sflag [#allocation5], %s1528
        %s1530 = sand.u32 %s266, 1
        %s1531 = smul.addr %s1530, 8
        %s1532 = scalar_lea.vmem [#allocation11], %s1531
        %s1533 = sand.u32 %s292, 1
        %s1534 = scalar_lea.sflag [#allocation13], %s1533
        %s1535 = sand.u32 %s292, 1
        %s1536 = smul.addr %s1535, 8
        %s1537 = scalar_lea.vmem [#allocation12], %s1536
        // Predicated region
        $region85: #{tpu_custom_call.1} parent=51 // pred_check
          %p1538 = pneg %p276
        $region86: #{tpu_custom_call.1} parent=51 // pred_check_branch
          %1540 = sbr.rel (%p1538) target = $region88
        $region87: #{tpu_custom_call.1} parent=51 // pred_region
          %p1541 = scmp.ge.s32.totalorder %s36, 1
          %s1542 = scalar_select %p1541, 1, 0
          %s1543 = ssub.s32 %s1542, 1
          %p1544 = scmp.gt.s32.totalorder %s1543, 0
          %s1545 = scalar_select %p1544, %s1543, 0
          %s1547 = ssub.s32 128, 128
          %1548 = vsyncadd %s1529, %s1547
          %s1549 = smul.addr %s1545, 2
          %s1550 = sadd.s32 %s35, %s1549
          %s1551 = smul.addr %s1550, 128
          %s1552 = scalar_lea.hbm %s8, %s1551
          %s1554 = sshll.u32 %s1532, 4
          %s1555 = int_to_ptr.vmem [resolvable:$true] %s1554
          %1557 = dma.vmem_to_hbm [thread:$0]  %s1555, 128, %s1552, %s1529
        $region88: #{tpu_custom_call.1} parent=51 // pred_fallthru
          _
        // Predicated region
        $region89: #{tpu_custom_call.1} parent=51 // pred_check
          %p1558 = pneg %p302
        $region90: #{tpu_custom_call.1} parent=51 // pred_check_branch
          %1560 = sbr.rel (%p1558) target = $region92
        $region91: #{tpu_custom_call.1} parent=51 // pred_region
          %s1562 = ssub.s32 128, 128
          %1563 = vsyncadd %s1534, %s1562
          %s1564 = smul.addr %s35, 128
          %s1565 = scalar_lea.hbm %s9, %s1564
          %s1567 = sshll.u32 %s1537, 4
          %s1568 = int_to_ptr.vmem [resolvable:$true] %s1567
          %1570 = dma.vmem_to_hbm [thread:$0]  %s1568, 128, %s1565, %s1534
        $region92: #{tpu_custom_call.1} parent=51 // pred_fallthru
          _
      $region52: #{tpu_custom_call.1} parent=5 // pred_fallthru
        _
      %p1571 = scmp.le.s32.totalorder 2, %s26
      // Predicated region
      $region93: #{tpu_custom_call.1} parent=5 // pred_check
        %p1572 = pneg %p1571
      $region94: #{tpu_custom_call.1} parent=5 // pred_check_branch
        %1574 = sbr.rel (%p1572) target = $region96
      $region95: #{tpu_custom_call.1} parent=5 // pred_region
        %s1575 = ssub.s32 %s26, 2
        // Predicated region
        $region97: #{tpu_custom_call.1} parent=95 // pred_check
          %p1576 = pneg %p282
        $region98: #{tpu_custom_call.1} parent=95 // pred_check_branch
          %1578 = sbr.rel (%p1576) target = $region100
        $region99: #{tpu_custom_call.1} parent=95 // pred_region
          %s1579 = sand.u32 %s267, 1
          %s1580 = scalar_lea.sflag [#allocation5], %s1579
          %s1581 = sand.u32 %s267, 1
          %s1582 = smul.addr %s1581, 8
          %s1583 = scalar_lea.vmem [#allocation11], %s1582
          %1584 = dma.done %s1580, 128
        $region100: #{tpu_custom_call.1} parent=95 // pred_fallthru
          _
        // Predicated region
        $region101: #{tpu_custom_call.1} parent=95 // pred_check
          %p1585 = pneg %p308
        $region102: #{tpu_custom_call.1} parent=95 // pred_check_branch
          %1587 = sbr.rel (%p1585) target = $region104
        $region103: #{tpu_custom_call.1} parent=95 // pred_region
          %s1588 = sand.u32 %s293, 1
          %s1589 = scalar_lea.sflag [#allocation13], %s1588
          %s1590 = sand.u32 %s293, 1
          %s1591 = smul.addr %s1590, 8
          %s1592 = scalar_lea.vmem [#allocation12], %s1591
          %1593 = dma.done %s1589, 128
        $region104: #{tpu_custom_call.1} parent=95 // pred_fallthru
          _
      $region96: #{tpu_custom_call.1} parent=5 // pred_fallthru
        _
    $region6: #{tpu_custom_call.1} parent=1 // loop_footer
      %s30 = sadd.s32 1, %s26
    $region7: #{tpu_custom_call.1} parent=1 // loop_footer_branch
      %25 = sbr.rel target = $region3
    $region8: #{tpu_custom_call.1} parent=1 // loop_exit
      _
    %1594 = vsyncpa [#allocation4], 1
    %s1595 = scalar_lea.sflag [#allocation4], 1
    %1596 = vsyncpa %s1595, 1
    %1597 = vsyncpa [#allocation7], 1
    %1598 = vsyncpa [#allocation5], 1
    %s1599 = scalar_lea.sflag [#allocation5], 1
    %1600 = vsyncpa %s1599, 1
    %1601 = vsyncpa [#allocation13], 1
    %s1602 = scalar_lea.sflag [#allocation13], 1
    %1603 = vsyncpa %s1602, 1

</llo_original>
